<compile_context>
chip_gen: v7x
topology: tpu7x:2x2x1
jax: 0.10.0
libtpu: 0.0.40
codegen_flags: <defaults>
</compile_context>

<pallas_src>
import math
import functools

import jax
import jax.numpy as jnp
from jax.experimental import pallas as pl
from jax.experimental.pallas import tpu as pltpu


def attention_kernel(x_ref, wq_ref, bq_ref, wkv_ref, bkv_ref, wo_ref, bo_ref,
                     out_ref, kv_ref, *, num_heads):
    """One (batch, query-tile) grid step.

    x_ref   : (1, S, H)  bf16  full sequence of this batch element
    wq_ref  : (H, H)     bf16  query projection weight
    bq_ref  : (1, H)     f32
    wkv_ref : (H, 2H)    bf16  fused key/value projection weight
    bkv_ref : (1, 2H)    f32
    wo_ref  : (H, H)     bf16  output projection weight
    bo_ref  : (1, H)     f32
    out_ref : (1, TQ, H) f32
    kv_ref  : (S, 2H)    bf16  persistent VMEM scratch (projected K|V)
    """
    qi = pl.program_id(1)
    S, H = x_ref.shape[1], x_ref.shape[2]
    TQ = out_ref.shape[1]
    hd = H // num_heads
    scale = 1.0 / math.sqrt(hd)

    x_full = x_ref[0]                                     # (S, H) bf16

    # --- K/V projection once per batch element (qi is the inner axis) ---
    @pl.when(qi == 0)
    def _():
        kv = jnp.dot(x_full, wkv_ref[...],
                     preferred_element_type=jnp.float32) + bkv_ref[...]
        kv_ref[...] = kv.astype(jnp.bfloat16)

    # --- query rows of this tile (sliced from the full-sequence block) ---
    if TQ == S:
        xq = x_full
    else:
        start = qi * TQ
        if TQ % 128 == 0:
            start = pl.multiple_of(start, 128)
        xq = x_ref[0, pl.ds(start, TQ), :]                # (TQ, H) bf16

    # --- Q projection; fold 1/sqrt(hd) into the bf16 downcast pass ---
    q = jnp.dot(xq, wq_ref[...],
                preferred_element_type=jnp.float32) + bq_ref[...]
    q = (q * scale).astype(jnp.bfloat16)                  # (TQ, H)

    kv = kv_ref[...]                                      # (S, 2H) bf16
    wo = wo_ref[...]                                      # (H, H)  bf16

    # --- per-head attention + fused output-projection accumulation ---
    acc = jnp.zeros((TQ, H), jnp.float32)
    for h in range(num_heads):
        lo = h * hd
        q_h = q[:, lo:lo + hd]                            # (TQ, hd) bf16
        k_h = kv[:, lo:lo + hd]                           # (S,  hd) bf16
        v_h = kv[:, H + lo:H + lo + hd]                   # (S,  hd) bf16

        s = jnp.einsum('qd,kd->qk', q_h, k_h,
                       preferred_element_type=jnp.float32)          # (TQ, S) f32
        m = jnp.max(s, axis=-1, keepdims=True)
        e = jnp.exp(s - m)
        denom = jnp.sum(e, axis=-1, keepdims=True)
        # approx reciprocal -> EUP slot; rows sum to 1 within ~2^-12 (inference OK)
        p = (e * pl.reciprocal(denom, approx=True)).astype(jnp.bfloat16)
        # attn_dropout: identity at inference

        ctx_h = jnp.dot(p, v_h, preferred_element_type=jnp.float32)  # (TQ, hd)
        acc = acc + jnp.dot(ctx_h.astype(jnp.bfloat16), wo[lo:lo + hd, :],
                            preferred_element_type=jnp.float32)      # (TQ, H)

    out = acc + bo_ref[...]
    # proj_dropout: identity at inference
    out_ref[0] = out.astype(out_ref.dtype)


def _vmem_bytes(S, H, tq):
    """Rough per-core working-set estimate (bytes)."""
    weights = 2 * (H * H + H * 2 * H + H * H)      # bf16, single-buffered
    biases = 4 * (H + 2 * H + H)
    x_blk = 2 * (2 * S * H)                        # bf16, double-buffered
    kv_scr = 2 * S * 2 * H                         # bf16 scratch
    out_blk = 2 * (4 * tq * H)                     # f32, double-buffered
    f32_tmp = 2 * 4 * tq * H + 3 * 4 * tq * S + 4 * S * 2 * H
    return weights + biases + x_blk + kv_scr + out_blk + f32_tmp


def _pick_tq(S, H, budget=20 << 20):
    """Largest query tile dividing S whose working set fits the VMEM budget."""
    if _vmem_bytes(S, H, S) <= budget:
        return S
    for t in (512, 256, 128):
        if S % t == 0 and _vmem_bytes(S, H, t) <= budget:
            return t
    for t in (512, 256, 128):
        if S % t == 0:
            return t
    return S


def attention_forward(x, params, *, num_heads):
    """x: (B, S, H) float32. Returns (attention_output, weights=None) like the
    PyTorch Attention module with vis=False."""
    B, S, H = x.shape
    assert H % num_heads == 0
    TQ = _pick_tq(S, H)
    assert S % TQ == 0
    nq = S // TQ

    bf = jnp.bfloat16
    xb = x.astype(bf)
    wq = params["wq"].astype(bf)
    wkv = jnp.concatenate([params["wk"], params["wv"]], axis=1).astype(bf)  # (H,2H)
    wo = params["wo"].astype(bf)
    bq = params["bq"].astype(jnp.float32).reshape(1, H)
    bkv = jnp.concatenate([params["bk"], params["bv"]]).astype(jnp.float32).reshape(1, 2 * H)
    bo = params["bo"].astype(jnp.float32).reshape(1, H)

    def const_spec(shape):
        return pl.BlockSpec(shape, lambda b, qi: (0,) * len(shape),
                            pipeline_mode=pl.Buffered(1))

    # Advisory cost estimate: QKV + output projections + QK^T + P@V, exp/score.
    flops = 8 * B * S * H * H + 4 * B * S * S * H
    transcendentals = B * num_heads * S * S
    bytes_accessed = (B * S * H * 2          # bf16 activation read (once)
                      + 4 * H * H * 2        # bf16 weights
                      + 4 * H * 4            # f32 biases
                      + B * S * H * 4)       # f32 output
    cost = pl.CostEstimate(flops=flops,
                           transcendentals=transcendentals,
                           bytes_accessed=bytes_accessed)

    vmem_limit = int(min(max(2 * _vmem_bytes(S, H, TQ), 16 << 20), 48 << 20))

    out = pl.pallas_call(
        functools.partial(attention_kernel, num_heads=num_heads),
        out_shape=jax.ShapeDtypeStruct((B, S, H), jnp.float32),
        grid=(B, nq),
        in_specs=[
            pl.BlockSpec((1, S, H), lambda b, qi: (b, 0, 0)),   # full sequence
            const_spec((H, H)),        # wq
            const_spec((1, H)),        # bq
            const_spec((H, 2 * H)),    # wkv
            const_spec((1, 2 * H)),    # bkv
            const_spec((H, H)),        # wo
            const_spec((1, H)),        # bo
        ],
        out_specs=pl.BlockSpec((1, TQ, H), lambda b, qi: (b, qi, 0)),
        scratch_shapes=[pltpu.VMEM((S, 2 * H), jnp.bfloat16)],   # projected K|V
        compiler_params=pltpu.CompilerParams(
            dimension_semantics=("parallel", "arbitrary"),
            vmem_limit_bytes=vmem_limit),
        cost_estimate=cost,
    )(xb, wq, bq, wkv, bkv, wo, bo)

    weights = None   # vis=False in the reference configuration
    return out, weights


# ---------------- pure JAX reference (for verification) ----------------
def attention_ref(x, p, *, num_heads):
    B, S, H = x.shape
    hd = H // num_heads
    q = x @ p["wq"] + p["bq"]
    k = x @ p["wk"] + p["bk"]
    v = x @ p["wv"] + p["bv"]

    def split(t):  # (B,S,H) -> (B,nh,S,hd)
        return t.reshape(B, S, num_heads, hd).transpose(0, 2, 1, 3)

    qh, kh, vh = split(q), split(k), split(v)
    scores = jnp.einsum("bhqd,bhkd->bhqk", qh, kh) / math.sqrt(hd)
    probs = jax.nn.softmax(scores, axis=-1)
    ctx = jnp.einsum("bhqk,bhkd->bhqd", probs, vh)
    ctx = ctx.transpose(0, 2, 1, 3).reshape(B, S, H)
    return ctx @ p["wo"] + p["bo"]


if __name__ == "__main__":
    # Small ViT-ish config consistent with the module.
    B, S, H = 2, 8, 32
    num_heads = 4

    key = jax.random.PRNGKey(0)
    ks = jax.random.split(key, 10)

    def lin(k, fan_in, fan_out):
        # xavier-uniform-ish deterministic init (layout: (in, out), i.e. x @ W)
        limit = math.sqrt(6.0 / (fan_in + fan_out))
        return jax.random.uniform(k, (fan_in, fan_out), jnp.float32, -limit, limit)

    params = dict(
        wq=lin(ks[0], H, H), bq=0.01 * jax.random.normal(ks[4], (H,), jnp.float32),
        wk=lin(ks[1], H, H), bk=0.01 * jax.random.normal(ks[5], (H,), jnp.float32),
        wv=lin(ks[2], H, H), bv=0.01 * jax.random.normal(ks[6], (H,), jnp.float32),
        wo=lin(ks[3], H, H), bo=0.01 * jax.random.normal(ks[7], (H,), jnp.float32),
    )

    x = jax.random.normal(ks[8], (B, S, H), jnp.float32)

    out, attn_weights = attention_forward(x, params, num_heads=num_heads)
    out = jax.block_until_ready(out)

    ref = attention_ref(x, params, num_heads=num_heads)
    assert out.shape == (B, S, H)
    assert attn_weights is None
    assert jnp.allclose(out, ref, rtol=2e-2, atol=2e-2), "mismatch vs JAX reference"

    print("KERNEL_OK")
</pallas_src>

<mosaic_0001>
module attributes {stable_mosaic.version = 11 : i64} {
  func.func @attention_kernel(%arg0: i32, %arg1: i32, %arg2: memref<1x8x32xbf16, #tpu.memory_space<vmem>>, %arg3: memref<32x32xbf16, #tpu.memory_space<vmem>>, %arg4: memref<1x32xf32, #tpu.memory_space<vmem>>, %arg5: memref<32x64xbf16, #tpu.memory_space<vmem>>, %arg6: memref<1x64xf32, #tpu.memory_space<vmem>>, %arg7: memref<32x32xbf16, #tpu.memory_space<vmem>>, %arg8: memref<1x32xf32, #tpu.memory_space<vmem>>, %arg9: memref<1x8x32xf32, #tpu.memory_space<vmem>>, %arg10: memref<8x64xbf16, #tpu.memory_space<vmem>>) attributes {dimension_semantics = [#tpu.dimension_semantics<parallel>, #tpu.dimension_semantics<arbitrary>], iteration_bounds = array<i64: 2, 1>, scalar_prefetch = 0 : i64, scratch_operands = 1 : i64, tpu.core_type = #tpu.core_type<tc>, window_params = [{transform_indices = @transform_0, window_bounds = array<i64: 1, 8, 32>}, {pipeline_mode = #tpu.pipeline_mode<synchronous>, transform_indices = @transform_1, window_bounds = array<i64: 32, 32>}, {pipeline_mode = #tpu.pipeline_mode<synchronous>, transform_indices = @transform_2, window_bounds = array<i64: 1, 32>}, {pipeline_mode = #tpu.pipeline_mode<synchronous>, transform_indices = @transform_3, window_bounds = array<i64: 32, 64>}, {pipeline_mode = #tpu.pipeline_mode<synchronous>, transform_indices = @transform_4, window_bounds = array<i64: 1, 64>}, {pipeline_mode = #tpu.pipeline_mode<synchronous>, transform_indices = @transform_5, window_bounds = array<i64: 32, 32>}, {pipeline_mode = #tpu.pipeline_mode<synchronous>, transform_indices = @transform_6, window_bounds = array<i64: 1, 32>}, {transform_indices = @transform_7, window_bounds = array<i64: 1, 8, 32>}]} {
    %c0 = arith.constant 0 : index
    %c0_0 = arith.constant 0 : index
    %c0_1 = arith.constant 0 : index
    %0 = vector.load %arg2[%c0, %c0_0, %c0_1] : memref<1x8x32xbf16, #tpu.memory_space<vmem>>, vector<1x8x32xbf16>
    %1 = vector.shape_cast %0 : vector<1x8x32xbf16> to vector<8x32xbf16>
    %c0_i32 = arith.constant 0 : i32
    %2 = arith.cmpi eq, %arg1, %c0_i32 : i32
    %3 = arith.extui %2 : i1 to i32
    %c0_i32_2 = arith.constant 0 : i32
    %4 = arith.cmpi ne, %3, %c0_i32_2 : i32
    scf.if %4 {
      %c0_38 = arith.constant 0 : index
      %c0_39 = arith.constant 0 : index
      %102 = vector.load %arg5[%c0_38, %c0_39] : memref<32x64xbf16, #tpu.memory_space<vmem>>, vector<32x64xbf16>
      %cst_40 = arith.constant dense<0.000000e+00> : vector<8x64xf32>
      %103 = tpu.matmul %1, %102, %cst_40 {dimension_numbers = #tpu.dot_dimension_numbers<[1], [0], [0], [1], [0, 0, 1, 1], [], []>} : vector<8x32xbf16>, vector<32x64xbf16>, vector<8x64xf32> -> vector<8x64xf32>
      %c0_41 = arith.constant 0 : index
      %c0_42 = arith.constant 0 : index
      %104 = vector.load %arg6[%c0_41, %c0_42] : memref<1x64xf32, #tpu.memory_space<vmem>>, vector<1x64xf32>
      %105 = vector.broadcast %104 : vector<1x64xf32> to vector<8x64xf32>
      %106 = arith.addf %103, %105 : vector<8x64xf32>
      %107 = arith.truncf %106 : vector<8x64xf32> to vector<8x64xbf16>
      %c0_43 = arith.constant 0 : index
      %c0_44 = arith.constant 0 : index
      %108 = vector.load %arg10[%c0_43, %c0_44] : memref<8x64xbf16, #tpu.memory_space<vmem>>, vector<8x64xbf16>
      tpu.vector_store %arg10[%c0_43, %c0_44], %107 {strides = array<i32>} : memref<8x64xbf16, #tpu.memory_space<vmem>>, vector<8x64xbf16>,
    } else {
    }
    %c0_3 = arith.constant 0 : index
    %c0_4 = arith.constant 0 : index
    %5 = vector.load %arg3[%c0_3, %c0_4] : memref<32x32xbf16, #tpu.memory_space<vmem>>, vector<32x32xbf16>
    %cst = arith.constant dense<0.000000e+00> : vector<8x32xf32>
    %6 = tpu.matmul %1, %5, %cst {dimension_numbers = #tpu.dot_dimension_numbers<[1], [0], [0], [1], [0, 0, 1, 1], [], []>} : vector<8x32xbf16>, vector<32x32xbf16>, vector<8x32xf32> -> vector<8x32xf32>
    %c0_5 = arith.constant 0 : index
    %c0_6 = arith.constant 0 : index
    %7 = vector.load %arg4[%c0_5, %c0_6] : memref<1x32xf32, #tpu.memory_space<vmem>>, vector<1x32xf32>
    %8 = vector.broadcast %7 : vector<1x32xf32> to vector<8x32xf32>
    %9 = arith.addf %6, %8 : vector<8x32xf32>
    %cst_7 = arith.constant 0.353553385 : f32
    %10 = vector.broadcast %cst_7 : f32 to vector<8x32xf32>
    %11 = arith.mulf %9, %10 : vector<8x32xf32>
    %12 = arith.truncf %11 : vector<8x32xf32> to vector<8x32xbf16>
    %c0_8 = arith.constant 0 : index
    %c0_9 = arith.constant 0 : index
    %13 = vector.load %arg10[%c0_8, %c0_9] : memref<8x64xbf16, #tpu.memory_space<vmem>>, vector<8x64xbf16>
    %c0_10 = arith.constant 0 : index
    %c0_11 = arith.constant 0 : index
    %14 = vector.load %arg7[%c0_10, %c0_11] : memref<32x32xbf16, #tpu.memory_space<vmem>>, vector<32x32xbf16>
    %cst_12 = arith.constant 0.000000e+00 : f32
    %15 = vector.broadcast %cst_12 : f32 to vector<8x32xf32>
    %16 = vector.extract_strided_slice %12 {offsets = [0, 0], sizes = [8, 8], strides = [1, 1]} : vector<8x32xbf16> to vector<8x8xbf16>
    %17 = vector.extract_strided_slice %13 {offsets = [0, 0], sizes = [8, 8], strides = [1, 1]} : vector<8x64xbf16> to vector<8x8xbf16>
    %18 = vector.extract_strided_slice %13 {offsets = [0, 32], sizes = [8, 8], strides = [1, 1]} : vector<8x64xbf16> to vector<8x8xbf16>
    "tpu.trace_start"() <{level = 10 : i32, message = "qd,kd->qk"}> : () -> ()
    %cst_13 = arith.constant dense<0.000000e+00> : vector<8x8xf32>
    %19 = tpu.matmul %16, %17, %cst_13 {dimension_numbers = #tpu.dot_dimension_numbers<[1], [1], [0], [0], [0, 0, 1, 0], [], []>} : vector<8x8xbf16>, vector<8x8xbf16>, vector<8x8xf32> -> vector<8x8xf32>
    "tpu.trace_stop"() : () -> ()
    %cst_14 = arith.constant dense<0xFF800000> : vector<8xf32>
    %20 = vector.multi_reduction <maximumf>, %19, %cst_14 [1] : vector<8x8xf32> to vector<8xf32>
    %21 = vector.shape_cast %20 : vector<8xf32> to vector<8x1xf32>
    %22 = vector.broadcast %21 : vector<8x1xf32> to vector<8x8xf32>
    %23 = arith.subf %19, %22 : vector<8x8xf32>
    %24 = math.exp %23 : vector<8x8xf32>
    %cst_15 = arith.constant dense<0.000000e+00> : vector<8xf32>
    %25 = vector.multi_reduction <add>, %24, %cst_15 [1] : vector<8x8xf32> to vector<8xf32>
    %26 = vector.shape_cast %25 : vector<8xf32> to vector<8x1xf32>
    %27 = tpu.reciprocal %26 {approx = true} : vector<8x1xf32> -> vector<8x1xf32>
    %28 = vector.broadcast %27 : vector<8x1xf32> to vector<8x8xf32>
    %29 = arith.mulf %24, %28 : vector<8x8xf32>
    %30 = arith.truncf %29 : vector<8x8xf32> to vector<8x8xbf16>
    %cst_16 = arith.constant dense<0.000000e+00> : vector<8x8xf32>
    %31 = tpu.matmul %30, %18, %cst_16 {dimension_numbers = #tpu.dot_dimension_numbers<[1], [0], [0], [1], [0, 0, 1, 1], [], []>} : vector<8x8xbf16>, vector<8x8xbf16>, vector<8x8xf32> -> vector<8x8xf32>
    %32 = arith.truncf %31 : vector<8x8xf32> to vector<8x8xbf16>
    %33 = vector.extract_strided_slice %14 {offsets = [0, 0], sizes = [8, 32], strides = [1, 1]} : vector<32x32xbf16> to vector<8x32xbf16>
    %cst_17 = arith.constant dense<0.000000e+00> : vector<8x32xf32>
    %34 = tpu.matmul %32, %33, %cst_17 {dimension_numbers = #tpu.dot_dimension_numbers<[1], [0], [0], [1], [0, 0, 1, 1], [], []>} : vector<8x8xbf16>, vector<8x32xbf16>, vector<8x32xf32> -> vector<8x32xf32>
    %35 = arith.addf %15, %34 : vector<8x32xf32>
    %36 = vector.extract_strided_slice %12 {offsets = [0, 8], sizes = [8, 8], strides = [1, 1]} : vector<8x32xbf16> to vector<8x8xbf16>
    %37 = vector.extract_strided_slice %13 {offsets = [0, 8], sizes = [8, 8], strides = [1, 1]} : vector<8x64xbf16> to vector<8x8xbf16>
    %38 = vector.extract_strided_slice %13 {offsets = [0, 40], sizes = [8, 8], strides = [1, 1]} : vector<8x64xbf16> to vector<8x8xbf16>
    "tpu.trace_start"() <{level = 10 : i32, message = "qd,kd->qk"}> : () -> ()
    %cst_18 = arith.constant dense<0.000000e+00> : vector<8x8xf32>
    %39 = tpu.matmul %36, %37, %cst_18 {dimension_numbers = #tpu.dot_dimension_numbers<[1], [1], [0], [0], [0, 0, 1, 0], [], []>} : vector<8x8xbf16>, vector<8x8xbf16>, vector<8x8xf32> -> vector<8x8xf32>
    "tpu.trace_stop"() : () -> ()
    %cst_19 = arith.constant dense<0xFF800000> : vector<8xf32>
    %40 = vector.multi_reduction <maximumf>, %39, %cst_19 [1] : vector<8x8xf32> to vector<8xf32>
    %41 = vector.shape_cast %40 : vector<8xf32> to vector<8x1xf32>
    %42 = vector.broadcast %41 : vector<8x1xf32> to vector<8x8xf32>
    %43 = arith.subf %39, %42 : vector<8x8xf32>
    %44 = math.exp %43 : vector<8x8xf32>
    %cst_20 = arith.constant dense<0.000000e+00> : vector<8xf32>
    %45 = vector.multi_reduction <add>, %44, %cst_20 [1] : vector<8x8xf32> to vector<8xf32>
    %46 = vector.shape_cast %45 : vector<8xf32> to vector<8x1xf32>
    %47 = tpu.reciprocal %46 {approx = true} : vector<8x1xf32> -> vector<8x1xf32>
    %48 = vector.broadcast %47 : vector<8x1xf32> to vector<8x8xf32>
    %49 = arith.mulf %44, %48 : vector<8x8xf32>
    %50 = arith.truncf %49 : vector<8x8xf32> to vector<8x8xbf16>
    %cst_21 = arith.constant dense<0.000000e+00> : vector<8x8xf32>
    %51 = tpu.matmul %50, %38, %cst_21 {dimension_numbers = #tpu.dot_dimension_numbers<[1], [0], [0], [1], [0, 0, 1, 1], [], []>} : vector<8x8xbf16>, vector<8x8xbf16>, vector<8x8xf32> -> vector<8x8xf32>
    %52 = arith.truncf %51 : vector<8x8xf32> to vector<8x8xbf16>
    %53 = vector.extract_strided_slice %14 {offsets = [8, 0], sizes = [8, 32], strides = [1, 1]} : vector<32x32xbf16> to vector<8x32xbf16>
    %cst_22 = arith.constant dense<0.000000e+00> : vector<8x32xf32>
    %54 = tpu.matmul %52, %53, %cst_22 {dimension_numbers = #tpu.dot_dimension_numbers<[1], [0], [0], [1], [0, 0, 1, 1], [], []>} : vector<8x8xbf16>, vector<8x32xbf16>, vector<8x32xf32> -> vector<8x32xf32>
    %55 = arith.addf %35, %54 : vector<8x32xf32>
    %56 = vector.extract_strided_slice %12 {offsets = [0, 16], sizes = [8, 8], strides = [1, 1]} : vector<8x32xbf16> to vector<8x8xbf16>
    %57 = vector.extract_strided_slice %13 {offsets = [0, 16], sizes = [8, 8], strides = [1, 1]} : vector<8x64xbf16> to vector<8x8xbf16>
    %58 = vector.extract_strided_slice %13 {offsets = [0, 48], sizes = [8, 8], strides = [1, 1]} : vector<8x64xbf16> to vector<8x8xbf16>
    "tpu.trace_start"() <{level = 10 : i32, message = "qd,kd->qk"}> : () -> ()
    %cst_23 = arith.constant dense<0.000000e+00> : vector<8x8xf32>
    %59 = tpu.matmul %56, %57, %cst_23 {dimension_numbers = #tpu.dot_dimension_numbers<[1], [1], [0], [0], [0, 0, 1, 0], [], []>} : vector<8x8xbf16>, vector<8x8xbf16>, vector<8x8xf32> -> vector<8x8xf32>
    "tpu.trace_stop"() : () -> ()
    %cst_24 = arith.constant dense<0xFF800000> : vector<8xf32>
    %60 = vector.multi_reduction <maximumf>, %59, %cst_24 [1] : vector<8x8xf32> to vector<8xf32>
    %61 = vector.shape_cast %60 : vector<8xf32> to vector<8x1xf32>
    %62 = vector.broadcast %61 : vector<8x1xf32> to vector<8x8xf32>
    %63 = arith.subf %59, %62 : vector<8x8xf32>
    %64 = math.exp %63 : vector<8x8xf32>
    %cst_25 = arith.constant dense<0.000000e+00> : vector<8xf32>
    %65 = vector.multi_reduction <add>, %64, %cst_25 [1] : vector<8x8xf32> to vector<8xf32>
    %66 = vector.shape_cast %65 : vector<8xf32> to vector<8x1xf32>
    %67 = tpu.reciprocal %66 {approx = true} : vector<8x1xf32> -> vector<8x1xf32>
    %68 = vector.broadcast %67 : vector<8x1xf32> to vector<8x8xf32>
    %69 = arith.mulf %64, %68 : vector<8x8xf32>
    %70 = arith.truncf %69 : vector<8x8xf32> to vector<8x8xbf16>
    %cst_26 = arith.constant dense<0.000000e+00> : vector<8x8xf32>
    %71 = tpu.matmul %70, %58, %cst_26 {dimension_numbers = #tpu.dot_dimension_numbers<[1], [0], [0], [1], [0, 0, 1, 1], [], []>} : vector<8x8xbf16>, vector<8x8xbf16>, vector<8x8xf32> -> vector<8x8xf32>
    %72 = arith.truncf %71 : vector<8x8xf32> to vector<8x8xbf16>
    %73 = vector.extract_strided_slice %14 {offsets = [16, 0], sizes = [8, 32], strides = [1, 1]} : vector<32x32xbf16> to vector<8x32xbf16>
    %cst_27 = arith.constant dense<0.000000e+00> : vector<8x32xf32>
    %74 = tpu.matmul %72, %73, %cst_27 {dimension_numbers = #tpu.dot_dimension_numbers<[1], [0], [0], [1], [0, 0, 1, 1], [], []>} : vector<8x8xbf16>, vector<8x32xbf16>, vector<8x32xf32> -> vector<8x32xf32>
    %75 = arith.addf %55, %74 : vector<8x32xf32>
    %76 = vector.extract_strided_slice %12 {offsets = [0, 24], sizes = [8, 8], strides = [1, 1]} : vector<8x32xbf16> to vector<8x8xbf16>
    %77 = vector.extract_strided_slice %13 {offsets = [0, 24], sizes = [8, 8], strides = [1, 1]} : vector<8x64xbf16> to vector<8x8xbf16>
    %78 = vector.extract_strided_slice %13 {offsets = [0, 56], sizes = [8, 8], strides = [1, 1]} : vector<8x64xbf16> to vector<8x8xbf16>
    "tpu.trace_start"() <{level = 10 : i32, message = "qd,kd->qk"}> : () -> ()
    %cst_28 = arith.constant dense<0.000000e+00> : vector<8x8xf32>
    %79 = tpu.matmul %76, %77, %cst_28 {dimension_numbers = #tpu.dot_dimension_numbers<[1], [1], [0], [0], [0, 0, 1, 0], [], []>} : vector<8x8xbf16>, vector<8x8xbf16>, vector<8x8xf32> -> vector<8x8xf32>
    "tpu.trace_stop"() : () -> ()
    %cst_29 = arith.constant dense<0xFF800000> : vector<8xf32>
    %80 = vector.multi_reduction <maximumf>, %79, %cst_29 [1] : vector<8x8xf32> to vector<8xf32>
    %81 = vector.shape_cast %80 : vector<8xf32> to vector<8x1xf32>
    %82 = vector.broadcast %81 : vector<8x1xf32> to vector<8x8xf32>
    %83 = arith.subf %79, %82 : vector<8x8xf32>
    %84 = math.exp %83 : vector<8x8xf32>
    %cst_30 = arith.constant dense<0.000000e+00> : vector<8xf32>
    %85 = vector.multi_reduction <add>, %84, %cst_30 [1] : vector<8x8xf32> to vector<8xf32>
    %86 = vector.shape_cast %85 : vector<8xf32> to vector<8x1xf32>
    %87 = tpu.reciprocal %86 {approx = true} : vector<8x1xf32> -> vector<8x1xf32>
    %88 = vector.broadcast %87 : vector<8x1xf32> to vector<8x8xf32>
    %89 = arith.mulf %84, %88 : vector<8x8xf32>
    %90 = arith.truncf %89 : vector<8x8xf32> to vector<8x8xbf16>
    %cst_31 = arith.constant dense<0.000000e+00> : vector<8x8xf32>
    %91 = tpu.matmul %90, %78, %cst_31 {dimension_numbers = #tpu.dot_dimension_numbers<[1], [0], [0], [1], [0, 0, 1, 1], [], []>} : vector<8x8xbf16>, vector<8x8xbf16>, vector<8x8xf32> -> vector<8x8xf32>
    %92 = arith.truncf %91 : vector<8x8xf32> to vector<8x8xbf16>
    %93 = vector.extract_strided_slice %14 {offsets = [24, 0], sizes = [8, 32], strides = [1, 1]} : vector<32x32xbf16> to vector<8x32xbf16>
    %cst_32 = arith.constant dense<0.000000e+00> : vector<8x32xf32>
    %94 = tpu.matmul %92, %93, %cst_32 {dimension_numbers = #tpu.dot_dimension_numbers<[1], [0], [0], [1], [0, 0, 1, 1], [], []>} : vector<8x8xbf16>, vector<8x32xbf16>, vector<8x32xf32> -> vector<8x32xf32>
    %95 = arith.addf %75, %94 : vector<8x32xf32>
    %c0_33 = arith.constant 0 : index
    %c0_34 = arith.constant 0 : index
    %96 = vector.load %arg8[%c0_33, %c0_34] : memref<1x32xf32, #tpu.memory_space<vmem>>, vector<1x32xf32>
    %97 = vector.broadcast %96 : vector<1x32xf32> to vector<8x32xf32>
    %98 = arith.addf %95, %97 : vector<8x32xf32>
    %c0_35 = arith.constant 0 : index
    %c0_36 = arith.constant 0 : index
    %c0_37 = arith.constant 0 : index
    %99 = vector.load %arg9[%c0_35, %c0_36, %c0_37] : memref<1x8x32xf32, #tpu.memory_space<vmem>>, vector<1x8x32xf32>
    %100 = vector.shape_cast %99 : vector<1x8x32xf32> to vector<8x32xf32>
    %101 = vector.shape_cast %98 : vector<8x32xf32> to vector<1x8x32xf32>
    tpu.vector_store %arg9[%c0_35, %c0_36, %c0_37], %101 {strides = array<i32>} : memref<1x8x32xf32, #tpu.memory_space<vmem>>, vector<1x8x32xf32>,
    return
  }
  func.func @transform_0(%arg0: i32, %arg1: i32) -> (i32, i32, i32) {
    %c0_i32 = arith.constant 0 : i32
    %c0_i32_0 = arith.constant 0 : i32
    %c0_i32_1 = arith.constant 0 : i32
    return %arg0, %c0_i32, %c0_i32_0 : i32, i32, i32
  }
  func.func @transform_1(%arg0: i32, %arg1: i32) -> (i32, i32) {
    %c0_i32 = arith.constant 0 : i32
    %c0_i32_0 = arith.constant 0 : i32
    %c0_i32_1 = arith.constant 0 : i32
    return %c0_i32, %c0_i32_0 : i32, i32
  }
  func.func @transform_2(%arg0: i32, %arg1: i32) -> (i32, i32) {
    %c0_i32 = arith.constant 0 : i32
    %c0_i32_0 = arith.constant 0 : i32
    %c0_i32_1 = arith.constant 0 : i32
    return %c0_i32, %c0_i32_0 : i32, i32
  }
  func.func @transform_3(%arg0: i32, %arg1: i32) -> (i32, i32) {
    %c0_i32 = arith.constant 0 : i32
    %c0_i32_0 = arith.constant 0 : i32
    %c0_i32_1 = arith.constant 0 : i32
    return %c0_i32, %c0_i32_0 : i32, i32
  }
  func.func @transform_4(%arg0: i32, %arg1: i32) -> (i32, i32) {
    %c0_i32 = arith.constant 0 : i32
    %c0_i32_0 = arith.constant 0 : i32
    %c0_i32_1 = arith.constant 0 : i32
    return %c0_i32, %c0_i32_0 : i32, i32
  }
  func.func @transform_5(%arg0: i32, %arg1: i32) -> (i32, i32) {
    %c0_i32 = arith.constant 0 : i32
    %c0_i32_0 = arith.constant 0 : i32
    %c0_i32_1 = arith.constant 0 : i32
    return %c0_i32, %c0_i32_0 : i32, i32
  }
  func.func @transform_6(%arg0: i32, %arg1: i32) -> (i32, i32) {
    %c0_i32 = arith.constant 0 : i32
    %c0_i32_0 = arith.constant 0 : i32
    %c0_i32_1 = arith.constant 0 : i32
    return %c0_i32, %c0_i32_0 : i32, i32
  }
  func.func @transform_7(%arg0: i32, %arg1: i32) -> (i32, i32, i32) {
    %c0_i32 = arith.constant 0 : i32
    %c0_i32_0 = arith.constant 0 : i32
    return %arg0, %arg1, %c0_i32 : i32, i32, i32
  }
}

</mosaic_0001>

<llo_original>
// kernel: tpu_custom_call.1
$region0: #{tpu_custom_call.1}
  #allocation0 [shape = 'u32[]', space=smem, size = 0x4, offset = 0x4, fixed_abs, tag = 'smem constant byte address 0x4 - core index']
  #allocation1 [shape = 'u32[144,128]{1,0:T(1,128)}', space=vmem, size = 0x12000, scoped, tag = 'internal scratch']
  #allocation2 [shape = 'bf16[8,64]{1,0:T(8,128)(2,1)}', space=vmem, size = 0x800, scoped, tag = 'scratch operand']
  %s0 = inlined_call_operand.hbm [shape: bf16[2,8,32], index: 0, kind: input, shape index: {}]
  %s1 = inlined_call_operand.hbm [shape: bf16[32,32], index: 1, kind: input, shape index: {}]
  %s2 = inlined_call_operand.vmem [shape: f32[1,32], index: 2, kind: input, shape index: {}]
  %s3 = inlined_call_operand.hbm [shape: bf16[32,64], index: 3, kind: input, shape index: {}]
  %s4 = inlined_call_operand.vmem [shape: f32[1,64], index: 4, kind: input, shape index: {}]
  %s5 = inlined_call_operand.vmem [shape: bf16[32,32], index: 5, kind: input, shape index: {}]
  %s6 = inlined_call_operand.vmem [shape: f32[1,32], index: 6, kind: input, shape index: {}]
  %s7 = inlined_call_operand.hbm [shape: f32[2,8,32], index: 7, kind: output, shape index: {}]
  %s8 = sld [smem:[#allocation0]]
  $region77: #{tpu_custom_call.1} parent=0
    _
  %s10 = ssub.s32 1, %s8
  %s11 = scalar_select 0, %s10, %s8
  $region1: #{tpu_custom_call.1} parent=0
    #allocation3 [shape = 'u8[4096]{0}', space=vmem, size = 0x1000, scoped, tag = 'input window, operand 0']
    #allocation4 [shape = 's32[2]{0}', space=sflag, size = 0x8, scoped, tag = 'scoped memory for tpu_custom_call.1']
    #allocation5 [shape = 's32[2]{0}', space=sflag, size = 0x8, scoped, tag = 'scoped memory for tpu_custom_call.1']
    #allocation6 [shape = 'u8[8192]{0}', space=vmem, size = 0x2000, scoped, tag = 'input window, operand 1, single buffered']
    #allocation7 [shape = 's32[1]{0}', space=sflag, size = 0x4, scoped, tag = 'scoped memory for tpu_custom_call.1']
    #allocation8 [shape = 'u8[8192]{0}', space=vmem, size = 0x2000, scoped, tag = 'input window, operand 3, single buffered']
    #allocation9 [shape = 'u8[8192]{0}', space=vmem, size = 0x2000, scoped, tag = 'output window, operand 0']
    %12 = vsyncpa [#allocation4], 0
    %s13 = scalar_lea.sflag [#allocation4], 1
    %14 = vsyncpa %s13, 0
    %15 = vsyncpa [#allocation7], 0
    %16 = vsyncpa [#allocation5], 0
    %s17 = scalar_lea.sflag [#allocation5], 1
    %18 = vsyncpa %s17, 0
    loop: start=0, step=1, limit=4
    $region2: #{tpu_custom_call.1} parent=1 // loop_pre_header
      _
    $region3: #{tpu_custom_call.1} parent=1 // loop_header
      %s20 = sphi 0, %s24
      %p21 = scmp.ge.s32.totalorder %s20, 4
      %s27 = sphi 0, %s39
      %s28 = sphi 0, %s35
      %s29 = sphi 0, %s27
      %s30 = sphi 0, %s28
      %s31 = sphi 0, %s29
      %s32 = sphi 0, %s30
      %s42 = sphi 0, %s44
      %s45 = sphi 0, %s42
      %s46 = sphi 0, %s45
      %s62 = sphi 0, %s46
      %s66 = sphi 0, %s66
      %s68 = sphi 0, %s66
      %s69 = sphi 0, %s68
      %s83 = sphi 0, %s69
      %s87 = sphi 0, %s87
      %s89 = sphi 0, %s87
      %s90 = sphi 0, %s89
      %s104 = sphi 0, %s90
      %s108 = sphi 0, %s108
      %s110 = sphi 0, %s108
      %s111 = sphi 0, %s110
      %s125 = sphi 0, %s111
      %s129 = sphi 0, %s129
      %s131 = sphi 0, %s129
      %s132 = sphi 0, %s131
      %s146 = sphi 0, %s132
      %s150 = sphi 0, %s150
      %s152 = sphi 0, %s150
      %s153 = sphi 0, %s152
      %s167 = sphi 0, %s153
      %s171 = sphi 0, %s171
      %s173 = sphi 0, %s171
      %s174 = sphi 0, %s173
      %s188 = sphi 0, %s174
      %s196 = sphi 0, %s198
      %s199 = sphi 0, %s196
      %s200 = sphi 0, %s199
      %s216 = sphi 0, %s200
    $region4: #{tpu_custom_call.1} parent=1 // loop_header_branch
      %23 = sbr.rel (%p21) target = $region8
    $region5: #{tpu_custom_call.1} parent=1 // loop_body
      %s25 = ssub.s32 %s20, 1
      %s26 = ssub.s32 %s20, 2
      %s33 = sadd.s32 1, %s28
      %p34 = scmp.ge.s32.totalorder %s33, 1
      %s35 = scalar_select %p34, 0, %s33
      %s36 = sadd.s32 1, %s27
      %s37 = scalar_select %p34, %s36, %s27
      %p38 = scmp.ge.s32.totalorder %s37, 2
      %s39 = scalar_select %p38, 0, %s37
      %s40 = ssub.s32 %s27, %s39
      %p41 = scmp.eq.s32.totalorder %s40, 0
      %s43 = sadd.s32 %s42, 1
      %s44 = scalar_select %p41, %s42, %s43
      %p47 = pneg %p41
      %p48 = scmp.eq.s32.totalorder %s20, 1
      %p49 = por %p47, %p48
      %p50 = scmp.ne.s32.totalorder %s42, %s45
      %p51 = scmp.eq.s32.totalorder %s20, 0
      %p52 = por %p50, %p51
      %p53 = scmp.ne.s32.totalorder %s42, %s45
      %p54 = scmp.eq.s32.totalorder %s25, 1
      %p55 = por %p53, %p54
      %p56 = scmp.ne.s32.totalorder %s45, %s46
      %p57 = scmp.eq.s32.totalorder %s25, 0
      %p58 = por %p56, %p57
      %p59 = scmp.ne.s32.totalorder %s45, %s46
      %p60 = scmp.eq.s32.totalorder %s26, 1
      %p61 = por %p59, %p60
      %p63 = scmp.ne.s32.totalorder %s46, %s62
      %p64 = scmp.eq.s32.totalorder %s26, 0
      %p65 = por %p63, %p64
      %s67 = sadd.s32 %s66, 1
      %p70 = scmp.eq.s32.totalorder %s20, 1
      %p71 = scmp.ne.s32.totalorder %s66, %s68
      %p72 = scmp.eq.s32.totalorder %s20, 0
      %p73 = por %p71, %p72
      %p74 = scmp.ne.s32.totalorder %s66, %s68
      %p75 = scmp.eq.s32.totalorder %s25, 1
      %p76 = por %p74, %p75
      %p77 = scmp.ne.s32.totalorder %s68, %s69
      %p78 = scmp.eq.s32.totalorder %s25, 0
      %p79 = por %p77, %p78
      %p80 = scmp.ne.s32.totalorder %s68, %s69
      %p81 = scmp.eq.s32.totalorder %s26, 1
      %p82 = por %p80, %p81
      %p84 = scmp.ne.s32.totalorder %s69, %s83
      %p85 = scmp.eq.s32.totalorder %s26, 0
      %p86 = por %p84, %p85
      %s88 = sadd.s32 %s87, 1
      %p91 = scmp.eq.s32.totalorder %s20, 1
      %p92 = scmp.ne.s32.totalorder %s87, %s89
      %p93 = scmp.eq.s32.totalorder %s20, 0
      %p94 = por %p92, %p93
      %p95 = scmp.ne.s32.totalorder %s87, %s89
      %p96 = scmp.eq.s32.totalorder %s25, 1
      %p97 = por %p95, %p96
      %p98 = scmp.ne.s32.totalorder %s89, %s90
      %p99 = scmp.eq.s32.totalorder %s25, 0
      %p100 = por %p98, %p99
      %p101 = scmp.ne.s32.totalorder %s89, %s90
      %p102 = scmp.eq.s32.totalorder %s26, 1
      %p103 = por %p101, %p102
      %p105 = scmp.ne.s32.totalorder %s90, %s104
      %p106 = scmp.eq.s32.totalorder %s26, 0
      %p107 = por %p105, %p106
      %s109 = sadd.s32 %s108, 1
      %p112 = scmp.eq.s32.totalorder %s20, 1
      %p113 = scmp.ne.s32.totalorder %s108, %s110
      %p114 = scmp.eq.s32.totalorder %s20, 0
      %p115 = por %p113, %p114
      %p116 = scmp.ne.s32.totalorder %s108, %s110
      %p117 = scmp.eq.s32.totalorder %s25, 1
      %p118 = por %p116, %p117
      %p119 = scmp.ne.s32.totalorder %s110, %s111
      %p120 = scmp.eq.s32.totalorder %s25, 0
      %p121 = por %p119, %p120
      %p122 = scmp.ne.s32.totalorder %s110, %s111
      %p123 = scmp.eq.s32.totalorder %s26, 1
      %p124 = por %p122, %p123
      %p126 = scmp.ne.s32.totalorder %s111, %s125
      %p127 = scmp.eq.s32.totalorder %s26, 0
      %p128 = por %p126, %p127
      %s130 = sadd.s32 %s129, 1
      %p133 = scmp.eq.s32.totalorder %s20, 1
      %p134 = scmp.ne.s32.totalorder %s129, %s131
      %p135 = scmp.eq.s32.totalorder %s20, 0
      %p136 = por %p134, %p135
      %p137 = scmp.ne.s32.totalorder %s129, %s131
      %p138 = scmp.eq.s32.totalorder %s25, 1
      %p139 = por %p137, %p138
      %p140 = scmp.ne.s32.totalorder %s131, %s132
      %p141 = scmp.eq.s32.totalorder %s25, 0
      %p142 = por %p140, %p141
      %p143 = scmp.ne.s32.totalorder %s131, %s132
      %p144 = scmp.eq.s32.totalorder %s26, 1
      %p145 = por %p143, %p144
      %p147 = scmp.ne.s32.totalorder %s132, %s146
      %p148 = scmp.eq.s32.totalorder %s26, 0
      %p149 = por %p147, %p148
      %s151 = sadd.s32 %s150, 1
      %p154 = scmp.eq.s32.totalorder %s20, 1
      %p155 = scmp.ne.s32.totalorder %s150, %s152
      %p156 = scmp.eq.s32.totalorder %s20, 0
      %p157 = por %p155, %p156
      %p158 = scmp.ne.s32.totalorder %s150, %s152
      %p159 = scmp.eq.s32.totalorder %s25, 1
      %p160 = por %p158, %p159
      %p161 = scmp.ne.s32.totalorder %s152, %s153
      %p162 = scmp.eq.s32.totalorder %s25, 0
      %p163 = por %p161, %p162
      %p164 = scmp.ne.s32.totalorder %s152, %s153
      %p165 = scmp.eq.s32.totalorder %s26, 1
      %p166 = por %p164, %p165
      %p168 = scmp.ne.s32.totalorder %s153, %s167
      %p169 = scmp.eq.s32.totalorder %s26, 0
      %p170 = por %p168, %p169
      %s172 = sadd.s32 %s171, 1
      %p175 = scmp.eq.s32.totalorder %s20, 1
      %p176 = scmp.ne.s32.totalorder %s171, %s173
      %p177 = scmp.eq.s32.totalorder %s20, 0
      %p178 = por %p176, %p177
      %p179 = scmp.ne.s32.totalorder %s171, %s173
      %p180 = scmp.eq.s32.totalorder %s25, 1
      %p181 = por %p179, %p180
      %p182 = scmp.ne.s32.totalorder %s173, %s174
      %p183 = scmp.eq.s32.totalorder %s25, 0
      %p184 = por %p182, %p183
      %p185 = scmp.ne.s32.totalorder %s173, %s174
      %p186 = scmp.eq.s32.totalorder %s26, 1
      %p187 = por %p185, %p186
      %p189 = scmp.ne.s32.totalorder %s174, %s188
      %p190 = scmp.eq.s32.totalorder %s26, 0
      %p191 = por %p189, %p190
      %s192 = ssub.s32 %s27, %s39
      %s193 = ssub.s32 %s28, %s35
      %s194 = sor.u32 %s192, %s193
      %p195 = scmp.eq.s32.totalorder %s194, 0
      %s197 = sadd.s32 %s196, 1
      %s198 = scalar_select %p195, %s196, %s197
      %p201 = pneg %p195
      %p202 = scmp.eq.s32.totalorder %s20, 1
      %p203 = por %p201, %p202
      %p204 = scmp.ne.s32.totalorder %s196, %s199
      %p205 = scmp.eq.s32.totalorder %s20, 0
      %p206 = por %p204, %p205
      %p207 = scmp.ne.s32.totalorder %s196, %s199
      %p208 = scmp.eq.s32.totalorder %s25, 1
      %p209 = por %p207, %p208
      %p210 = scmp.ne.s32.totalorder %s199, %s200
      %p211 = scmp.eq.s32.totalorder %s25, 0
      %p212 = por %p210, %p211
      %p213 = scmp.ne.s32.totalorder %s199, %s200
      %p214 = scmp.eq.s32.totalorder %s26, 1
      %p215 = por %p213, %p214
      %p217 = scmp.ne.s32.totalorder %s200, %s216
      %p218 = scmp.eq.s32.totalorder %s26, 0
      %p219 = por %p217, %p218
      %p220 = scmp.le.s32.totalorder 1, %s20
      %p221 = scmp.lt.s32.totalorder %s20, 3
      %p222 = pnand %p220, %p221
      %p223 = pneg %p222
      // Predicated region
      $region9: #{tpu_custom_call.1} parent=5 // pred_check
        _
      $region10: #{tpu_custom_call.1} parent=5 // pred_check_branch
        %225 = sbr.rel (%p222) target = $region12
      $region11: #{tpu_custom_call.1} parent=5 // pred_region
        %s226 = ssub.s32 %s20, 1
        // Predicated region
        $region13: #{tpu_custom_call.1} parent=11 // pred_check
          %p227 = pneg %p79
        $region14: #{tpu_custom_call.1} parent=11 // pred_check_branch
          %229 = sbr.rel (%p227) target = $region16
        $region15: #{tpu_custom_call.1} parent=11 // pred_region
          %s231 = ssub.s32 256, 256
          %232 = vsyncadd [#allocation7], %s231
          %s233 = sshll.u32 [#allocation6], 4
          %s234 = int_to_ptr.vmem [resolvable:$true] %s233
          %239 = dma.hbm_to_vmem [thread:$0]  %s1, 256, %s234, [#allocation7], 64, 64, 4
        $region16: #{tpu_custom_call.1} parent=11 // pred_fallthru
          _
        // Predicated region
        $region17: #{tpu_custom_call.1} parent=11 // pred_check
          %p240 = pneg %p100
        $region18: #{tpu_custom_call.1} parent=11 // pred_check_branch
          %242 = sbr.rel (%p240) target = $region20
        $region19: #{tpu_custom_call.1} parent=11 // pred_region
          _
        $region20: #{tpu_custom_call.1} parent=11 // pred_fallthru
          _
        // Predicated region
        $region21: #{tpu_custom_call.1} parent=11 // pred_check
          %p243 = pneg %p121
        $region22: #{tpu_custom_call.1} parent=11 // pred_check_branch
          %245 = sbr.rel (%p243) target = $region24
        $region23: #{tpu_custom_call.1} parent=11 // pred_region
          %s247 = ssub.s32 256, 256
          %248 = vsyncadd [#allocation7], %s247
          %s249 = sshll.u32 [#allocation8], 4
          %s250 = int_to_ptr.vmem [resolvable:$true] %s249
          %255 = dma.hbm_to_vmem [thread:$0]  %s3, 256, %s250, [#allocation7], 64, 64, 4
        $region24: #{tpu_custom_call.1} parent=11 // pred_fallthru
          _
        // Predicated region
        $region25: #{tpu_custom_call.1} parent=11 // pred_check
          %p256 = pneg %p142
        $region26: #{tpu_custom_call.1} parent=11 // pred_check_branch
          %258 = sbr.rel (%p256) target = $region28
        $region27: #{tpu_custom_call.1} parent=11 // pred_region
          _
        $region28: #{tpu_custom_call.1} parent=11 // pred_fallthru
          _
        // Predicated region
        $region29: #{tpu_custom_call.1} parent=11 // pred_check
          %p259 = pneg %p163
        $region30: #{tpu_custom_call.1} parent=11 // pred_check_branch
          %261 = sbr.rel (%p259) target = $region32
        $region31: #{tpu_custom_call.1} parent=11 // pred_region
          _
        $region32: #{tpu_custom_call.1} parent=11 // pred_fallthru
          _
        // Predicated region
        $region33: #{tpu_custom_call.1} parent=11 // pred_check
          %p262 = pneg %p184
        $region34: #{tpu_custom_call.1} parent=11 // pred_check_branch
          %264 = sbr.rel (%p262) target = $region36
        $region35: #{tpu_custom_call.1} parent=11 // pred_region
          _
        $region36: #{tpu_custom_call.1} parent=11 // pred_fallthru
          _
      $region12: #{tpu_custom_call.1} parent=5 // pred_fallthru
        _
      %p265 = scmp.lt.s32.totalorder %s20, 2
      // Predicated region
      $region37: #{tpu_custom_call.1} parent=5 // pred_check
        %p266 = pneg %p265
      $region38: #{tpu_custom_call.1} parent=5 // pred_check_branch
        %268 = sbr.rel (%p266) target = $region40
      $region39: #{tpu_custom_call.1} parent=5 // pred_region
        // Predicated region
        $region41: #{tpu_custom_call.1} parent=39 // pred_check
          %p269 = pneg %p52
        $region42: #{tpu_custom_call.1} parent=39 // pred_check_branch
          %271 = sbr.rel (%p269) target = $region44
        $region43: #{tpu_custom_call.1} parent=39 // pred_region
          %s272 = sand.u32 %s42, 1
          %s273 = scalar_lea.sflag [#allocation4], %s272
          %s274 = sand.u32 %s42, 1
          %s275 = smul.addr %s274, 4
          %s276 = scalar_lea.vmem [#allocation3], %s275
          %s278 = ssub.s32 64, 64
          %279 = vsyncadd %s273, %s278
          %s280 = smul.addr %s27, 64
          %s281 = scalar_lea.hbm %s0, %s280
          %s283 = sshll.u32 %s276, 4
          %s284 = int_to_ptr.vmem [resolvable:$true] %s283
          %286 = dma.hbm_to_vmem [thread:$0]  %s281, 64, %s284, %s273
        $region44: #{tpu_custom_call.1} parent=39 // pred_fallthru
          _
      $region40: #{tpu_custom_call.1} parent=5 // pred_fallthru
        _
      %p287 = scmp.le.s32.totalorder 1, %s20
      %p288 = scmp.lt.s32.totalorder %s20, 3
      %p289 = pnand %p287, %p288
      %p290 = pneg %p289
      // Predicated region
      $region45: #{tpu_custom_call.1} parent=5 // pred_check
        _
      $region46: #{tpu_custom_call.1} parent=5 // pred_check_branch
        %292 = sbr.rel (%p289) target = $region48
      $region47: #{tpu_custom_call.1} parent=5 // pred_region
        %s293 = ssub.s32 %s20, 1
        %s294 = sand.u32 %s45, 1
        %s295 = scalar_lea.sflag [#allocation4], %s294
        %s296 = sand.u32 %s45, 1
        %s297 = smul.addr %s296, 4
        %s298 = scalar_lea.vmem [#allocation3], %s297
        // Predicated region
        $region49: #{tpu_custom_call.1} parent=47 // pred_check
          %p299 = pneg %p58
        $region50: #{tpu_custom_call.1} parent=47 // pred_check_branch
          %301 = sbr.rel (%p299) target = $region52
        $region51: #{tpu_custom_call.1} parent=47 // pred_region
          %302 = dma.done %s295, 64
        $region52: #{tpu_custom_call.1} parent=47 // pred_fallthru
          _
        // Predicated region
        $region53: #{tpu_custom_call.1} parent=47 // pred_check
          %p303 = pneg %p79
        $region54: #{tpu_custom_call.1} parent=47 // pred_check_branch
          %305 = sbr.rel (%p303) target = $region56
        $region55: #{tpu_custom_call.1} parent=47 // pred_region
          %306 = dma.done [#allocation7], 256
        $region56: #{tpu_custom_call.1} parent=47 // pred_fallthru
          _
        // Predicated region
        $region57: #{tpu_custom_call.1} parent=47 // pred_check
          %p307 = pneg %p121
        $region58: #{tpu_custom_call.1} parent=47 // pred_check_branch
          %309 = sbr.rel (%p307) target = $region60
        $region59: #{tpu_custom_call.1} parent=47 // pred_region
          %310 = dma.done [#allocation7], 256
        $region60: #{tpu_custom_call.1} parent=47 // pred_fallthru
          _
        %s311 = sand.u32 %s45, 1
        %s312 = scalar_lea.sflag [#allocation4], %s311
        %s313 = sand.u32 %s45, 1
        %s314 = smul.addr %s313, 4
        %s315 = scalar_lea.vmem [#allocation3], %s314
        %p316 = pneg %p58
        %p317 = pneg %p55
        %p318 = pneg %p79
        %p319 = pneg %p76
        %p320 = pneg %p100
        %p321 = pneg %p97
        %p322 = pneg %p121
        %p323 = pneg %p118
        %p324 = pneg %p142
        %p325 = pneg %p139
        %p326 = pneg %p163
        %p327 = pneg %p160
        %p328 = pneg %p184
        %p329 = pneg %p181
        %p330 = pneg %p212
        %p331 = pneg %p209
        %s332 = sand.u32 %s199, 1
        %s333 = scalar_lea.sflag [#allocation5], %s332
        %s334 = sand.u32 %s199, 1
        %s335 = smul.addr %s334, 8
        %s336 = scalar_lea.vmem [#allocation9], %s335
        %v338 = vld [vmem:[%s298] sm:$0xf]
        %p339 = scmp.eq.s32.totalorder %s30, 0
        // Predicated region
        $region61: #{tpu_custom_call.1} parent=47 // pred_check
          %p340 = pneg %p339
        $region62: #{tpu_custom_call.1} parent=47 // pred_check_branch
          %342 = sbr.rel (%p340) target = $region64
        $region63: #{tpu_custom_call.1} parent=47 // pred_region
          %v343 = vld [vmem:[#allocation8] sm:$0xf]
          %v344 = vld [vmem:[#allocation8 + $0x4] sm:$0xf]
          %v345 = vld [vmem:[#allocation8 + $0x8] sm:$0xf]
          %v346 = vld [vmem:[#allocation8 + $0xc] sm:$0xf]
          %v347 = vld [vmem:[%s4] sm:$0x1]
          %v349 = vlaneseq
          %v350 = vshrl.u32 %v349, 7
          %v351 = vsub.s32 0, %v350
          %v352 = vrot.slane %v347, %v351
          %v358 = vunpack.c.l.b16 %v343
          %v359 = vunpack.c.l.b16 %v344
          %v360 = vunpack.c.l.b16 %v345
          %v361 = vunpack.c.l.b16 %v346
          %v362 = vpack.c.b16 %v359, %v358
          %v363 = vpack.c.b16 %v361, %v360
          %vm366 = vcmask 261120
          %v368 = vsel %vm366, %v338, 0
          %370 = vmatprep.subr.bf16.mxu0 0
          %371 = vmatpush1.bf16.msra.mxu0 %v362
          %372 = vmatprep.subr.bf16.mxu0 0
          %373 = vmatpush1.bf16.msra.mxu0 %v363
          %374 = vmatprep.subr.bf16.mxu0 0
          %375 = vmatpush1.bf16.msra.mxu0 0
          %376 = vmatprep.subr.bf16.mxu0 0
          %377 = vmatpush1.bf16.msra.mxu0 0
          %378 = vmatprep.subr.bf16.mxu0 0
          %379 = vmatpush1.bf16.msra.mxu0 0
          %380 = vmatprep.subr.bf16.mxu0 0
          %381 = vmatpush1.bf16.msra.mxu0 0
          %382 = vmatprep.subr.bf16.mxu0 0
          %383 = vmatpush1.bf16.msra.mxu0 0
          %384 = vmatprep.subr.bf16.mxu0 0
          %385 = vmatpush1.bf16.msra.mxu0 0
          %386 = vmatprep.subr.bf16.mxu0 0
          %387 = vmatpush1.bf16.msra.mxu0 0
          %388 = vmatprep.subr.bf16.mxu0 0
          %389 = vmatpush1.bf16.msra.mxu0 0
          %390 = vmatprep.subr.bf16.mxu0 0
          %391 = vmatpush1.bf16.msra.mxu0 0
          %392 = vmatprep.subr.bf16.mxu0 0
          %393 = vmatpush1.bf16.msra.mxu0 0
          %394 = vmatprep.subr.bf16.mxu0 0
          %395 = vmatpush1.bf16.msra.mxu0 0
          %396 = vmatprep.subr.bf16.mxu0 0
          %397 = vmatpush1.bf16.msra.mxu0 0
          %398 = vmatprep.subr.bf16.mxu0 0
          %399 = vmatpush1.bf16.msra.mxu0 0
          %400 = vmatprep.subr.bf16.mxu0 0
          %401 = vmatpush1.bf16.msra.mxu0 0
          %402 = vmatprep.mubr.bf16.mxu0 0
          %403 = vmatmul.mubr.bf16.gmra.mrb[0].mxu0 %v368
          %v404 = vpop.f32.mrb[0].mxu0
          %v405 = vadd.f32 %v352, %v404
          %v406 = vpop.f32.mrb[0].mxu0
          %v407 = vpop.f32.mrb[0].mxu0
          %v408 = vpop.f32.mrb[0].mxu0
          %409 = vdwg.mxu0
          %v410 = vpack.c.bf16 %v405, %v405
          %vm411 = vcmask 519168
          %412 = vst.msk [vmem:[#allocation2] sm:$0xf] %vm411, %v410
        $region64: #{tpu_custom_call.1} parent=47 // pred_fallthru
          _
        %v413 = vld [vmem:[#allocation6] sm:$0xf]
        %v414 = vld [vmem:[#allocation6 + $0x4] sm:$0xf]
        %v415 = vld [vmem:[#allocation6 + $0x8] sm:$0xf]
        %v416 = vld [vmem:[#allocation6 + $0xc] sm:$0xf]
        %v417 = vld [vmem:[%s2] sm:$0x1]
        %v419 = vlaneseq
        %v420 = vshrl.u32 %v419, 7
        %v421 = vsub.s32 0, %v420
        %v422 = vrot.slane %v417, %v421
        %v428 = vunpack.c.l.b16 %v413
        %v429 = vunpack.c.l.b16 %v414
        %v430 = vunpack.c.l.b16 %v415
        %v431 = vunpack.c.l.b16 %v416
        %v432 = vpack.c.b16 %v429, %v428
        %v433 = vpack.c.b16 %v431, %v430
        %vm436 = vcmask 261120
        %v438 = vsel %vm436, %v338, 0
        %440 = vmatprep.subr.bf16.mxu0 0
        %441 = vmatpush1.bf16.msra.mxu0 %v432
        %442 = vmatprep.subr.bf16.mxu0 0
        %443 = vmatpush1.bf16.msra.mxu0 %v433
        %444 = vmatprep.subr.bf16.mxu0 0
        %445 = vmatpush1.bf16.msra.mxu0 0
        %446 = vmatprep.subr.bf16.mxu0 0
        %447 = vmatpush1.bf16.msra.mxu0 0
        %448 = vmatprep.subr.bf16.mxu0 0
        %449 = vmatpush1.bf16.msra.mxu0 0
        %450 = vmatprep.subr.bf16.mxu0 0
        %451 = vmatpush1.bf16.msra.mxu0 0
        %452 = vmatprep.subr.bf16.mxu0 0
        %453 = vmatpush1.bf16.msra.mxu0 0
        %454 = vmatprep.subr.bf16.mxu0 0
        %455 = vmatpush1.bf16.msra.mxu0 0
        %456 = vmatprep.subr.bf16.mxu0 0
        %457 = vmatpush1.bf16.msra.mxu0 0
        %458 = vmatprep.subr.bf16.mxu0 0
        %459 = vmatpush1.bf16.msra.mxu0 0
        %460 = vmatprep.subr.bf16.mxu0 0
        %461 = vmatpush1.bf16.msra.mxu0 0
        %462 = vmatprep.subr.bf16.mxu0 0
        %463 = vmatpush1.bf16.msra.mxu0 0
        %464 = vmatprep.subr.bf16.mxu0 0
        %465 = vmatpush1.bf16.msra.mxu0 0
        %466 = vmatprep.subr.bf16.mxu0 0
        %467 = vmatpush1.bf16.msra.mxu0 0
        %468 = vmatprep.subr.bf16.mxu0 0
        %469 = vmatpush1.bf16.msra.mxu0 0
        %470 = vmatprep.subr.bf16.mxu0 0
        %471 = vmatpush1.bf16.msra.mxu0 0
        %472 = vmatprep.mubr.bf16.mxu0 0
        %473 = vmatmul.mubr.bf16.gmra.mrb[0].mxu0 %v438
        %v474 = vpop.f32.mrb[0].mxu0
        %v475 = vadd.f32 %v422, %v474
        %v476 = vpop.f32.mrb[0].mxu0
        %v477 = vpop.f32.mrb[0].mxu0
        %v478 = vpop.f32.mrb[0].mxu0
        %479 = vdwg.mxu0
        %v480 = vmul.f32 %v475, 0.35355338
        %v481 = vpack.c.bf16 %v480, %v480
        %v482 = vld [vmem:[#allocation2] sm:$0xf]
        %v483 = vld [vmem:[%s5] sm:$0xf]
        %v484 = vld [vmem:[%s5 + $0x4] sm:$0xf]
        %v485 = vld [vmem:[%s5 + $0x8] sm:$0xf]
        %v486 = vld [vmem:[%s5 + $0xc] sm:$0xf]
        %vm487 = vcmask 64512
        %v489 = vsel %vm487, %v481, 0
        %v492 = vsel %vm487, %v482, 0
        %494 = vmatprep.subr.bf16.mxu0 0
        %495 = vmatpush1.bf16.xpose.msra.mxu0 %v492
        %496 = vmatprep.subr.bf16.mxu0 0
        %497 = vmatpush1.bf16.xpose.msra.mxu0 0
        %498 = vmatprep.subr.bf16.mxu0 0
        %499 = vmatpush1.bf16.xpose.msra.mxu0 0
        %500 = vmatprep.subr.bf16.mxu0 0
        %501 = vmatpush1.bf16.xpose.msra.mxu0 0
        %502 = vmatprep.subr.bf16.mxu0 0
        %503 = vmatpush1.bf16.xpose.msra.mxu0 0
        %504 = vmatprep.subr.bf16.mxu0 0
        %505 = vmatpush1.bf16.xpose.msra.mxu0 0
        %506 = vmatprep.subr.bf16.mxu0 0
        %507 = vmatpush1.bf16.xpose.msra.mxu0 0
        %508 = vmatprep.subr.bf16.mxu0 0
        %509 = vmatpush1.bf16.xpose.msra.mxu0 0
        %510 = vmatprep.subr.bf16.mxu0 0
        %511 = vmatpush1.bf16.xpose.msra.mxu0 0
        %512 = vmatprep.subr.bf16.mxu0 0
        %513 = vmatpush1.bf16.xpose.msra.mxu0 0
        %514 = vmatprep.subr.bf16.mxu0 0
        %515 = vmatpush1.bf16.xpose.msra.mxu0 0
        %516 = vmatprep.subr.bf16.mxu0 0
        %517 = vmatpush1.bf16.xpose.msra.mxu0 0
        %518 = vmatprep.subr.bf16.mxu0 0
        %519 = vmatpush1.bf16.xpose.msra.mxu0 0
        %520 = vmatprep.subr.bf16.mxu0 0
        %521 = vmatpush1.bf16.xpose.msra.mxu0 0
        %522 = vmatprep.subr.bf16.mxu0 0
        %523 = vmatpush1.bf16.xpose.msra.mxu0 0
        %524 = vmatprep.subr.bf16.mxu0 0
        %525 = vmatpush1.bf16.xpose.msra.mxu0 0
        %526 = vmatprep.mubr.bf16.mxu0 0
        %527 = vmatmul.mubr.bf16.gmra.mrb[0].mxu0 %v489
        %v528 = vpop.f32.mrb[0].mxu0
        %v529 = vadd.f32 0.0, %v528
        %v530 = vpop.f32.mrb[0].mxu0
        %v531 = vpop.f32.mrb[0].mxu0
        %v532 = vpop.f32.mrb[0].mxu0
        %533 = vdwg.mxu0
        %v534 = vsel %vm487, %v529, -inf
        %535 = vmax.xlane.f32.xlu0 %v534
        %v536 = vpop.xlane.xlu0 %535
        %v537 = vsub.f32 %v529, %v536
        %v538 = vmul.f32 %v537, 1.442695
        %v539 = vpow.pop %v538
        %v540 = vsel %vm487, %v539, 0.0
        %541 = vadd.xlane.f32.xlu0 %v540
        %v542 = vpop.xlane.xlu0 %541
        %v543 = vrcp.pop %v542
        %v544 = vmul.f32 %v539, %v543
        %v545 = vpack.c.bf16 %v544, %v544
        %v547 = vunpack.c.l.b16 %v482
        %v548 = vpack.c.b16 %v547, %v547
        %549 = vrot.lane.b32.xlu0 %v548, 96
        %v550 = vpop.permute.xlu0 %549
        %v552 = vsel %vm487, %v545, 0
        %vm554 = vcmask 1043456
        %v556 = vsel %vm554, %v550, 0
        %558 = vmatprep.subr.bf16.mxu0 0
        %559 = vmatpush1.bf16.msra.mxu0 %v556
        %560 = vmatprep.subr.bf16.mxu0 0
        %561 = vmatpush1.bf16.msra.mxu0 0
        %562 = vmatprep.subr.bf16.mxu0 0
        %563 = vmatpush1.bf16.msra.mxu0 0
        %564 = vmatprep.subr.bf16.mxu0 0
        %565 = vmatpush1.bf16.msra.mxu0 0
        %566 = vmatprep.subr.bf16.mxu0 0
        %567 = vmatpush1.bf16.msra.mxu0 0
        %568 = vmatprep.subr.bf16.mxu0 0
        %569 = vmatpush1.bf16.msra.mxu0 0
        %570 = vmatprep.subr.bf16.mxu0 0
        %571 = vmatpush1.bf16.msra.mxu0 0
        %572 = vmatprep.subr.bf16.mxu0 0
        %573 = vmatpush1.bf16.msra.mxu0 0
        %574 = vmatprep.subr.bf16.mxu0 0
        %575 = vmatpush1.bf16.msra.mxu0 0
        %576 = vmatprep.subr.bf16.mxu0 0
        %577 = vmatpush1.bf16.msra.mxu0 0
        %578 = vmatprep.subr.bf16.mxu0 0
        %579 = vmatpush1.bf16.msra.mxu0 0
        %580 = vmatprep.subr.bf16.mxu0 0
        %581 = vmatpush1.bf16.msra.mxu0 0
        %582 = vmatprep.subr.bf16.mxu0 0
        %583 = vmatpush1.bf16.msra.mxu0 0
        %584 = vmatprep.subr.bf16.mxu0 0
        %585 = vmatpush1.bf16.msra.mxu0 0
        %586 = vmatprep.subr.bf16.mxu0 0
        %587 = vmatpush1.bf16.msra.mxu0 0
        %588 = vmatprep.subr.bf16.mxu0 0
        %589 = vmatpush1.bf16.msra.mxu0 0
        %590 = vmatprep.mubr.bf16.mxu0 0
        %591 = vmatmul.mubr.bf16.gmra.mrb[0].mxu0 %v552
        %v592 = vpop.f32.mrb[0].mxu0
        %v593 = vadd.f32 0.0, %v592
        %v594 = vpop.f32.mrb[0].mxu0
        %v595 = vpop.f32.mrb[0].mxu0
        %v596 = vpop.f32.mrb[0].mxu0
        %597 = vdwg.mxu0
        %v598 = vpack.c.bf16 %v593, %v593
        %600 = vrot.lane.b32.xlu0 %v481, 120
        %v601 = vpop.permute.xlu0 %600
        %602 = vrot.lane.b32.xlu0 %v548, 120
        %v603 = vpop.permute.xlu0 %602
        %v605 = vsel %vm487, %v601, 0
        %v608 = vsel %vm487, %v603, 0
        %610 = vmatprep.subr.bf16.mxu0 0
        %611 = vmatpush1.bf16.xpose.msra.mxu0 %v608
        %612 = vmatprep.subr.bf16.mxu0 0
        %613 = vmatpush1.bf16.xpose.msra.mxu0 0
        %614 = vmatprep.subr.bf16.mxu0 0
        %615 = vmatpush1.bf16.xpose.msra.mxu0 0
        %616 = vmatprep.subr.bf16.mxu0 0
        %617 = vmatpush1.bf16.xpose.msra.mxu0 0
        %618 = vmatprep.subr.bf16.mxu0 0
        %619 = vmatpush1.bf16.xpose.msra.mxu0 0
        %620 = vmatprep.subr.bf16.mxu0 0
        %621 = vmatpush1.bf16.xpose.msra.mxu0 0
        %622 = vmatprep.subr.bf16.mxu0 0
        %623 = vmatpush1.bf16.xpose.msra.mxu0 0
        %624 = vmatprep.subr.bf16.mxu0 0
        %625 = vmatpush1.bf16.xpose.msra.mxu0 0
        %626 = vmatprep.subr.bf16.mxu0 0
        %627 = vmatpush1.bf16.xpose.msra.mxu0 0
        %628 = vmatprep.subr.bf16.mxu0 0
        %629 = vmatpush1.bf16.xpose.msra.mxu0 0
        %630 = vmatprep.subr.bf16.mxu0 0
        %631 = vmatpush1.bf16.xpose.msra.mxu0 0
        %632 = vmatprep.subr.bf16.mxu0 0
        %633 = vmatpush1.bf16.xpose.msra.mxu0 0
        %634 = vmatprep.subr.bf16.mxu0 0
        %635 = vmatpush1.bf16.xpose.msra.mxu0 0
        %636 = vmatprep.subr.bf16.mxu0 0
        %637 = vmatpush1.bf16.xpose.msra.mxu0 0
        %638 = vmatprep.subr.bf16.mxu0 0
        %639 = vmatpush1.bf16.xpose.msra.mxu0 0
        %640 = vmatprep.subr.bf16.mxu0 0
        %641 = vmatpush1.bf16.xpose.msra.mxu0 0
        %642 = vmatprep.mubr.bf16.mxu0 0
        %643 = vmatmul.mubr.bf16.gmra.mrb[0].mxu0 %v605
        %v644 = vpop.f32.mrb[0].mxu0
        %v645 = vadd.f32 0.0, %v644
        %v646 = vpop.f32.mrb[0].mxu0
        %v647 = vpop.f32.mrb[0].mxu0
        %v648 = vpop.f32.mrb[0].mxu0
        %649 = vdwg.mxu0
        %v650 = vsel %vm487, %v645, -inf
        %651 = vmax.xlane.f32.xlu0 %v650
        %v652 = vpop.xlane.xlu0 %651
        %v653 = vsub.f32 %v645, %v652
        %v654 = vmul.f32 %v653, 1.442695
        %v655 = vpow.pop %v654
        %v656 = vsel %vm487, %v655, 0.0
        %657 = vadd.xlane.f32.xlu0 %v656
        %v658 = vpop.xlane.xlu0 %657
        %v659 = vrcp.pop %v658
        %v660 = vmul.f32 %v655, %v659
        %v661 = vpack.c.bf16 %v660, %v660
        %662 = vrot.lane.b32.xlu0 %v548, 88
        %v663 = vpop.permute.xlu0 %662
        %v665 = vsel %vm487, %v661, 0
        %v668 = vsel %vm554, %v663, 0
        %670 = vmatprep.subr.bf16.mxu0 0
        %671 = vmatpush1.bf16.msra.mxu0 %v668
        %672 = vmatprep.subr.bf16.mxu0 0
        %673 = vmatpush1.bf16.msra.mxu0 0
        %674 = vmatprep.subr.bf16.mxu0 0
        %675 = vmatpush1.bf16.msra.mxu0 0
        %676 = vmatprep.subr.bf16.mxu0 0
        %677 = vmatpush1.bf16.msra.mxu0 0
        %678 = vmatprep.subr.bf16.mxu0 0
        %679 = vmatpush1.bf16.msra.mxu0 0
        %680 = vmatprep.subr.bf16.mxu0 0
        %681 = vmatpush1.bf16.msra.mxu0 0
        %682 = vmatprep.subr.bf16.mxu0 0
        %683 = vmatpush1.bf16.msra.mxu0 0
        %684 = vmatprep.subr.bf16.mxu0 0
        %685 = vmatpush1.bf16.msra.mxu0 0
        %686 = vmatprep.subr.bf16.mxu0 0
        %687 = vmatpush1.bf16.msra.mxu0 0
        %688 = vmatprep.subr.bf16.mxu0 0
        %689 = vmatpush1.bf16.msra.mxu0 0
        %690 = vmatprep.subr.bf16.mxu0 0
        %691 = vmatpush1.bf16.msra.mxu0 0
        %692 = vmatprep.subr.bf16.mxu0 0
        %693 = vmatpush1.bf16.msra.mxu0 0
        %694 = vmatprep.subr.bf16.mxu0 0
        %695 = vmatpush1.bf16.msra.mxu0 0
        %696 = vmatprep.subr.bf16.mxu0 0
        %697 = vmatpush1.bf16.msra.mxu0 0
        %698 = vmatprep.subr.bf16.mxu0 0
        %699 = vmatpush1.bf16.msra.mxu0 0
        %700 = vmatprep.subr.bf16.mxu0 0
        %701 = vmatpush1.bf16.msra.mxu0 0
        %702 = vmatprep.mubr.bf16.mxu0 0
        %703 = vmatmul.mubr.bf16.gmra.mrb[0].mxu0 %v665
        %v704 = vpop.f32.mrb[0].mxu0
        %v705 = vadd.f32 0.0, %v704
        %v706 = vpop.f32.mrb[0].mxu0
        %v707 = vpop.f32.mrb[0].mxu0
        %v708 = vpop.f32.mrb[0].mxu0
        %709 = vdwg.mxu0
        %v710 = vpack.c.bf16 %v705, %v705
        %v712 = vsel %vm487, %v710, 0
        %v715 = vsel %vm554, %v484, 0
        %717 = vmatprep.subr.bf16.mxu0 0
        %718 = vmatpush1.bf16.msra.mxu0 %v715
        %719 = vmatprep.subr.bf16.mxu0 0
        %720 = vmatpush1.bf16.msra.mxu0 0
        %721 = vmatprep.subr.bf16.mxu0 0
        %722 = vmatpush1.bf16.msra.mxu0 0
        %723 = vmatprep.subr.bf16.mxu0 0
        %724 = vmatpush1.bf16.msra.mxu0 0
        %725 = vmatprep.subr.bf16.mxu0 0
        %726 = vmatpush1.bf16.msra.mxu0 0
        %727 = vmatprep.subr.bf16.mxu0 0
        %728 = vmatpush1.bf16.msra.mxu0 0
        %729 = vmatprep.subr.bf16.mxu0 0
        %730 = vmatpush1.bf16.msra.mxu0 0
        %731 = vmatprep.subr.bf16.mxu0 0
        %732 = vmatpush1.bf16.msra.mxu0 0
        %733 = vmatprep.subr.bf16.mxu0 0
        %734 = vmatpush1.bf16.msra.mxu0 0
        %735 = vmatprep.subr.bf16.mxu0 0
        %736 = vmatpush1.bf16.msra.mxu0 0
        %737 = vmatprep.subr.bf16.mxu0 0
        %738 = vmatpush1.bf16.msra.mxu0 0
        %739 = vmatprep.subr.bf16.mxu0 0
        %740 = vmatpush1.bf16.msra.mxu0 0
        %741 = vmatprep.subr.bf16.mxu0 0
        %742 = vmatpush1.bf16.msra.mxu0 0
        %743 = vmatprep.subr.bf16.mxu0 0
        %744 = vmatpush1.bf16.msra.mxu0 0
        %745 = vmatprep.subr.bf16.mxu0 0
        %746 = vmatpush1.bf16.msra.mxu0 0
        %747 = vmatprep.subr.bf16.mxu0 0
        %748 = vmatpush1.bf16.msra.mxu0 0
        %749 = vmatprep.mubr.bf16.mxu0 0
        %750 = vmatmul.mubr.bf16.gmra.mrb[0].mxu0 %v712
        %v751 = vpop.f32.mrb[0].mxu0
        %v752 = vadd.f32 0.0, %v751
        %v753 = vpop.f32.mrb[0].mxu0
        %v754 = vpop.f32.mrb[0].mxu0
        %v755 = vpop.f32.mrb[0].mxu0
        %756 = vdwg.mxu0
        %v758 = vsel %vm487, %v598, 0
        %v761 = vsel %vm554, %v483, 0
        %763 = vmatprep.subr.bf16.mxu0 0
        %764 = vmatpush1.bf16.msra.mxu0 %v761
        %765 = vmatprep.subr.bf16.mxu0 0
        %766 = vmatpush1.bf16.msra.mxu0 0
        %767 = vmatprep.subr.bf16.mxu0 0
        %768 = vmatpush1.bf16.msra.mxu0 0
        %769 = vmatprep.subr.bf16.mxu0 0
        %770 = vmatpush1.bf16.msra.mxu0 0
        %771 = vmatprep.subr.bf16.mxu0 0
        %772 = vmatpush1.bf16.msra.mxu0 0
        %773 = vmatprep.subr.bf16.mxu0 0
        %774 = vmatpush1.bf16.msra.mxu0 0
        %775 = vmatprep.subr.bf16.mxu0 0
        %776 = vmatpush1.bf16.msra.mxu0 0
        %777 = vmatprep.subr.bf16.mxu0 0
        %778 = vmatpush1.bf16.msra.mxu0 0
        %779 = vmatprep.subr.bf16.mxu0 0
        %780 = vmatpush1.bf16.msra.mxu0 0
        %781 = vmatprep.subr.bf16.mxu0 0
        %782 = vmatpush1.bf16.msra.mxu0 0
        %783 = vmatprep.subr.bf16.mxu0 0
        %784 = vmatpush1.bf16.msra.mxu0 0
        %785 = vmatprep.subr.bf16.mxu0 0
        %786 = vmatpush1.bf16.msra.mxu0 0
        %787 = vmatprep.subr.bf16.mxu0 0
        %788 = vmatpush1.bf16.msra.mxu0 0
        %789 = vmatprep.subr.bf16.mxu0 0
        %790 = vmatpush1.bf16.msra.mxu0 0
        %791 = vmatprep.subr.bf16.mxu0 0
        %792 = vmatpush1.bf16.msra.mxu0 0
        %793 = vmatprep.subr.bf16.mxu0 0
        %794 = vmatpush1.bf16.msra.mxu0 0
        %795 = vmatprep.mubr.bf16.mxu0 0
        %796 = vmatmul.mubr.bf16.gmra.mrb[0].mxu0 %v758
        %v797 = vpop.f32.mrb[0].mxu0
        %v798 = vadd.f32 %v752, %v797
        %v799 = vpop.f32.mrb[0].mxu0
        %v800 = vpop.f32.mrb[0].mxu0
        %v801 = vpop.f32.mrb[0].mxu0
        %802 = vdwg.mxu0
        %803 = vrot.lane.b32.xlu0 %v481, 112
        %v804 = vpop.permute.xlu0 %803
        %805 = vrot.lane.b32.xlu0 %v548, 112
        %v806 = vpop.permute.xlu0 %805
        %v808 = vsel %vm487, %v804, 0
        %v811 = vsel %vm487, %v806, 0
        %813 = vmatprep.subr.bf16.mxu0 0
        %814 = vmatpush1.bf16.xpose.msra.mxu0 %v811
        %815 = vmatprep.subr.bf16.mxu0 0
        %816 = vmatpush1.bf16.xpose.msra.mxu0 0
        %817 = vmatprep.subr.bf16.mxu0 0
        %818 = vmatpush1.bf16.xpose.msra.mxu0 0
        %819 = vmatprep.subr.bf16.mxu0 0
        %820 = vmatpush1.bf16.xpose.msra.mxu0 0
        %821 = vmatprep.subr.bf16.mxu0 0
        %822 = vmatpush1.bf16.xpose.msra.mxu0 0
        %823 = vmatprep.subr.bf16.mxu0 0
        %824 = vmatpush1.bf16.xpose.msra.mxu0 0
        %825 = vmatprep.subr.bf16.mxu0 0
        %826 = vmatpush1.bf16.xpose.msra.mxu0 0
        %827 = vmatprep.subr.bf16.mxu0 0
        %828 = vmatpush1.bf16.xpose.msra.mxu0 0
        %829 = vmatprep.subr.bf16.mxu0 0
        %830 = vmatpush1.bf16.xpose.msra.mxu0 0
        %831 = vmatprep.subr.bf16.mxu0 0
        %832 = vmatpush1.bf16.xpose.msra.mxu0 0
        %833 = vmatprep.subr.bf16.mxu0 0
        %834 = vmatpush1.bf16.xpose.msra.mxu0 0
        %835 = vmatprep.subr.bf16.mxu0 0
        %836 = vmatpush1.bf16.xpose.msra.mxu0 0
        %837 = vmatprep.subr.bf16.mxu0 0
        %838 = vmatpush1.bf16.xpose.msra.mxu0 0
        %839 = vmatprep.subr.bf16.mxu0 0
        %840 = vmatpush1.bf16.xpose.msra.mxu0 0
        %841 = vmatprep.subr.bf16.mxu0 0
        %842 = vmatpush1.bf16.xpose.msra.mxu0 0
        %843 = vmatprep.subr.bf16.mxu0 0
        %844 = vmatpush1.bf16.xpose.msra.mxu0 0
        %845 = vmatprep.mubr.bf16.mxu0 0
        %846 = vmatmul.mubr.bf16.gmra.mrb[0].mxu0 %v808
        %v847 = vpop.f32.mrb[0].mxu0
        %v848 = vadd.f32 0.0, %v847
        %v849 = vpop.f32.mrb[0].mxu0
        %v850 = vpop.f32.mrb[0].mxu0
        %v851 = vpop.f32.mrb[0].mxu0
        %852 = vdwg.mxu0
        %v853 = vsel %vm487, %v848, -inf
        %854 = vmax.xlane.f32.xlu0 %v853
        %v855 = vpop.xlane.xlu0 %854
        %v856 = vsub.f32 %v848, %v855
        %v857 = vmul.f32 %v856, 1.442695
        %v858 = vpow.pop %v857
        %v859 = vsel %vm487, %v858, 0.0
        %860 = vadd.xlane.f32.xlu0 %v859
        %v861 = vpop.xlane.xlu0 %860
        %v862 = vrcp.pop %v861
        %v863 = vmul.f32 %v858, %v862
        %v864 = vpack.c.bf16 %v863, %v863
        %865 = vrot.lane.b32.xlu0 %v548, 80
        %v866 = vpop.permute.xlu0 %865
        %v868 = vsel %vm487, %v864, 0
        %v871 = vsel %vm554, %v866, 0
        %873 = vmatprep.subr.bf16.mxu0 0
        %874 = vmatpush1.bf16.msra.mxu0 %v871
        %875 = vmatprep.subr.bf16.mxu0 0
        %876 = vmatpush1.bf16.msra.mxu0 0
        %877 = vmatprep.subr.bf16.mxu0 0
        %878 = vmatpush1.bf16.msra.mxu0 0
        %879 = vmatprep.subr.bf16.mxu0 0
        %880 = vmatpush1.bf16.msra.mxu0 0
        %881 = vmatprep.subr.bf16.mxu0 0
        %882 = vmatpush1.bf16.msra.mxu0 0
        %883 = vmatprep.subr.bf16.mxu0 0
        %884 = vmatpush1.bf16.msra.mxu0 0
        %885 = vmatprep.subr.bf16.mxu0 0
        %886 = vmatpush1.bf16.msra.mxu0 0
        %887 = vmatprep.subr.bf16.mxu0 0
        %888 = vmatpush1.bf16.msra.mxu0 0
        %889 = vmatprep.subr.bf16.mxu0 0
        %890 = vmatpush1.bf16.msra.mxu0 0
        %891 = vmatprep.subr.bf16.mxu0 0
        %892 = vmatpush1.bf16.msra.mxu0 0
        %893 = vmatprep.subr.bf16.mxu0 0
        %894 = vmatpush1.bf16.msra.mxu0 0
        %895 = vmatprep.subr.bf16.mxu0 0
        %896 = vmatpush1.bf16.msra.mxu0 0
        %897 = vmatprep.subr.bf16.mxu0 0
        %898 = vmatpush1.bf16.msra.mxu0 0
        %899 = vmatprep.subr.bf16.mxu0 0
        %900 = vmatpush1.bf16.msra.mxu0 0
        %901 = vmatprep.subr.bf16.mxu0 0
        %902 = vmatpush1.bf16.msra.mxu0 0
        %903 = vmatprep.subr.bf16.mxu0 0
        %904 = vmatpush1.bf16.msra.mxu0 0
        %905 = vmatprep.mubr.bf16.mxu0 0
        %906 = vmatmul.mubr.bf16.gmra.mrb[0].mxu0 %v868
        %v907 = vpop.f32.mrb[0].mxu0
        %v908 = vadd.f32 0.0, %v907
        %v909 = vpop.f32.mrb[0].mxu0
        %v910 = vpop.f32.mrb[0].mxu0
        %v911 = vpop.f32.mrb[0].mxu0
        %912 = vdwg.mxu0
        %v913 = vpack.c.bf16 %v908, %v908
        %v915 = vsel %vm487, %v913, 0
        %v918 = vsel %vm554, %v485, 0
        %920 = vmatprep.subr.bf16.mxu0 0
        %921 = vmatpush1.bf16.msra.mxu0 %v918
        %922 = vmatprep.subr.bf16.mxu0 0
        %923 = vmatpush1.bf16.msra.mxu0 0
        %924 = vmatprep.subr.bf16.mxu0 0
        %925 = vmatpush1.bf16.msra.mxu0 0
        %926 = vmatprep.subr.bf16.mxu0 0
        %927 = vmatpush1.bf16.msra.mxu0 0
        %928 = vmatprep.subr.bf16.mxu0 0
        %929 = vmatpush1.bf16.msra.mxu0 0
        %930 = vmatprep.subr.bf16.mxu0 0
        %931 = vmatpush1.bf16.msra.mxu0 0
        %932 = vmatprep.subr.bf16.mxu0 0
        %933 = vmatpush1.bf16.msra.mxu0 0
        %934 = vmatprep.subr.bf16.mxu0 0
        %935 = vmatpush1.bf16.msra.mxu0 0
        %936 = vmatprep.subr.bf16.mxu0 0
        %937 = vmatpush1.bf16.msra.mxu0 0
        %938 = vmatprep.subr.bf16.mxu0 0
        %939 = vmatpush1.bf16.msra.mxu0 0
        %940 = vmatprep.subr.bf16.mxu0 0
        %941 = vmatpush1.bf16.msra.mxu0 0
        %942 = vmatprep.subr.bf16.mxu0 0
        %943 = vmatpush1.bf16.msra.mxu0 0
        %944 = vmatprep.subr.bf16.mxu0 0
        %945 = vmatpush1.bf16.msra.mxu0 0
        %946 = vmatprep.subr.bf16.mxu0 0
        %947 = vmatpush1.bf16.msra.mxu0 0
        %948 = vmatprep.subr.bf16.mxu0 0
        %949 = vmatpush1.bf16.msra.mxu0 0
        %950 = vmatprep.subr.bf16.mxu0 0
        %951 = vmatpush1.bf16.msra.mxu0 0
        %952 = vmatprep.mubr.bf16.mxu0 0
        %953 = vmatmul.mubr.bf16.gmra.mrb[0].mxu0 %v915
        %v954 = vpop.f32.mrb[0].mxu0
        %v955 = vadd.f32 0.0, %v954
        %v956 = vpop.f32.mrb[0].mxu0
        %v957 = vpop.f32.mrb[0].mxu0
        %v958 = vpop.f32.mrb[0].mxu0
        %959 = vdwg.mxu0
        %v960 = vadd.f32 %v798, %v955
        %961 = vrot.lane.b32.xlu0 %v481, 104
        %v962 = vpop.permute.xlu0 %961
        %963 = vrot.lane.b32.xlu0 %v548, 104
        %v964 = vpop.permute.xlu0 %963
        %v966 = vsel %vm487, %v962, 0
        %v969 = vsel %vm487, %v964, 0
        %971 = vmatprep.subr.bf16.mxu0 0
        %972 = vmatpush1.bf16.xpose.msra.mxu0 %v969
        %973 = vmatprep.subr.bf16.mxu0 0
        %974 = vmatpush1.bf16.xpose.msra.mxu0 0
        %975 = vmatprep.subr.bf16.mxu0 0
        %976 = vmatpush1.bf16.xpose.msra.mxu0 0
        %977 = vmatprep.subr.bf16.mxu0 0
        %978 = vmatpush1.bf16.xpose.msra.mxu0 0
        %979 = vmatprep.subr.bf16.mxu0 0
        %980 = vmatpush1.bf16.xpose.msra.mxu0 0
        %981 = vmatprep.subr.bf16.mxu0 0
        %982 = vmatpush1.bf16.xpose.msra.mxu0 0
        %983 = vmatprep.subr.bf16.mxu0 0
        %984 = vmatpush1.bf16.xpose.msra.mxu0 0
        %985 = vmatprep.subr.bf16.mxu0 0
        %986 = vmatpush1.bf16.xpose.msra.mxu0 0
        %987 = vmatprep.subr.bf16.mxu0 0
        %988 = vmatpush1.bf16.xpose.msra.mxu0 0
        %989 = vmatprep.subr.bf16.mxu0 0
        %990 = vmatpush1.bf16.xpose.msra.mxu0 0
        %991 = vmatprep.subr.bf16.mxu0 0
        %992 = vmatpush1.bf16.xpose.msra.mxu0 0
        %993 = vmatprep.subr.bf16.mxu0 0
        %994 = vmatpush1.bf16.xpose.msra.mxu0 0
        %995 = vmatprep.subr.bf16.mxu0 0
        %996 = vmatpush1.bf16.xpose.msra.mxu0 0
        %997 = vmatprep.subr.bf16.mxu0 0
        %998 = vmatpush1.bf16.xpose.msra.mxu0 0
        %999 = vmatprep.subr.bf16.mxu0 0
        %1000 = vmatpush1.bf16.xpose.msra.mxu0 0
        %1001 = vmatprep.subr.bf16.mxu0 0
        %1002 = vmatpush1.bf16.xpose.msra.mxu0 0
        %1003 = vmatprep.mubr.bf16.mxu0 0
        %1004 = vmatmul.mubr.bf16.gmra.mrb[0].mxu0 %v966
        %v1005 = vpop.f32.mrb[0].mxu0
        %v1006 = vadd.f32 0.0, %v1005
        %v1007 = vpop.f32.mrb[0].mxu0
        %v1008 = vpop.f32.mrb[0].mxu0
        %v1009 = vpop.f32.mrb[0].mxu0
        %1010 = vdwg.mxu0
        %v1011 = vsel %vm487, %v1006, -inf
        %1012 = vmax.xlane.f32.xlu0 %v1011
        %v1013 = vpop.xlane.xlu0 %1012
        %v1014 = vsub.f32 %v1006, %v1013
        %v1015 = vmul.f32 %v1014, 1.442695
        %v1016 = vpow.pop %v1015
        %v1017 = vsel %vm487, %v1016, 0.0
        %1018 = vadd.xlane.f32.xlu0 %v1017
        %v1019 = vpop.xlane.xlu0 %1018
        %v1020 = vrcp.pop %v1019
        %v1021 = vmul.f32 %v1016, %v1020
        %v1022 = vpack.c.bf16 %v1021, %v1021
        %1023 = vrot.lane.b32.xlu0 %v548, 72
        %v1024 = vpop.permute.xlu0 %1023
        %v1026 = vsel %vm487, %v1022, 0
        %v1029 = vsel %vm554, %v1024, 0
        %1031 = vmatprep.subr.bf16.mxu0 0
        %1032 = vmatpush1.bf16.msra.mxu0 %v1029
        %1033 = vmatprep.subr.bf16.mxu0 0
        %1034 = vmatpush1.bf16.msra.mxu0 0
        %1035 = vmatprep.subr.bf16.mxu0 0
        %1036 = vmatpush1.bf16.msra.mxu0 0
        %1037 = vmatprep.subr.bf16.mxu0 0
        %1038 = vmatpush1.bf16.msra.mxu0 0
        %1039 = vmatprep.subr.bf16.mxu0 0
        %1040 = vmatpush1.bf16.msra.mxu0 0
        %1041 = vmatprep.subr.bf16.mxu0 0
        %1042 = vmatpush1.bf16.msra.mxu0 0
        %1043 = vmatprep.subr.bf16.mxu0 0
        %1044 = vmatpush1.bf16.msra.mxu0 0
        %1045 = vmatprep.subr.bf16.mxu0 0
        %1046 = vmatpush1.bf16.msra.mxu0 0
        %1047 = vmatprep.subr.bf16.mxu0 0
        %1048 = vmatpush1.bf16.msra.mxu0 0
        %1049 = vmatprep.subr.bf16.mxu0 0
        %1050 = vmatpush1.bf16.msra.mxu0 0
        %1051 = vmatprep.subr.bf16.mxu0 0
        %1052 = vmatpush1.bf16.msra.mxu0 0
        %1053 = vmatprep.subr.bf16.mxu0 0
        %1054 = vmatpush1.bf16.msra.mxu0 0
        %1055 = vmatprep.subr.bf16.mxu0 0
        %1056 = vmatpush1.bf16.msra.mxu0 0
        %1057 = vmatprep.subr.bf16.mxu0 0
        %1058 = vmatpush1.bf16.msra.mxu0 0
        %1059 = vmatprep.subr.bf16.mxu0 0
        %1060 = vmatpush1.bf16.msra.mxu0 0
        %1061 = vmatprep.subr.bf16.mxu0 0
        %1062 = vmatpush1.bf16.msra.mxu0 0
        %1063 = vmatprep.mubr.bf16.mxu0 0
        %1064 = vmatmul.mubr.bf16.gmra.mrb[0].mxu0 %v1026
        %v1065 = vpop.f32.mrb[0].mxu0
        %v1066 = vadd.f32 0.0, %v1065
        %v1067 = vpop.f32.mrb[0].mxu0
        %v1068 = vpop.f32.mrb[0].mxu0
        %v1069 = vpop.f32.mrb[0].mxu0
        %1070 = vdwg.mxu0
        %v1071 = vpack.c.bf16 %v1066, %v1066
        %v1073 = vsel %vm487, %v1071, 0
        %v1076 = vsel %vm554, %v486, 0
        %1078 = vmatprep.subr.bf16.mxu0 0
        %1079 = vmatpush1.bf16.msra.mxu0 %v1076
        %1080 = vmatprep.subr.bf16.mxu0 0
        %1081 = vmatpush1.bf16.msra.mxu0 0
        %1082 = vmatprep.subr.bf16.mxu0 0
        %1083 = vmatpush1.bf16.msra.mxu0 0
        %1084 = vmatprep.subr.bf16.mxu0 0
        %1085 = vmatpush1.bf16.msra.mxu0 0
        %1086 = vmatprep.subr.bf16.mxu0 0
        %1087 = vmatpush1.bf16.msra.mxu0 0
        %1088 = vmatprep.subr.bf16.mxu0 0
        %1089 = vmatpush1.bf16.msra.mxu0 0
        %1090 = vmatprep.subr.bf16.mxu0 0
        %1091 = vmatpush1.bf16.msra.mxu0 0
        %1092 = vmatprep.subr.bf16.mxu0 0
        %1093 = vmatpush1.bf16.msra.mxu0 0
        %1094 = vmatprep.subr.bf16.mxu0 0
        %1095 = vmatpush1.bf16.msra.mxu0 0
        %1096 = vmatprep.subr.bf16.mxu0 0
        %1097 = vmatpush1.bf16.msra.mxu0 0
        %1098 = vmatprep.subr.bf16.mxu0 0
        %1099 = vmatpush1.bf16.msra.mxu0 0
        %1100 = vmatprep.subr.bf16.mxu0 0
        %1101 = vmatpush1.bf16.msra.mxu0 0
        %1102 = vmatprep.subr.bf16.mxu0 0
        %1103 = vmatpush1.bf16.msra.mxu0 0
        %1104 = vmatprep.subr.bf16.mxu0 0
        %1105 = vmatpush1.bf16.msra.mxu0 0
        %1106 = vmatprep.subr.bf16.mxu0 0
        %1107 = vmatpush1.bf16.msra.mxu0 0
        %1108 = vmatprep.subr.bf16.mxu0 0
        %1109 = vmatpush1.bf16.msra.mxu0 0
        %1110 = vmatprep.mubr.bf16.mxu0 0
        %1111 = vmatmul.mubr.bf16.gmra.mrb[0].mxu0 %v1073
        %v1112 = vpop.f32.mrb[0].mxu0
        %v1113 = vadd.f32 0.0, %v1112
        %v1114 = vpop.f32.mrb[0].mxu0
        %v1115 = vpop.f32.mrb[0].mxu0
        %v1116 = vpop.f32.mrb[0].mxu0
        %1117 = vdwg.mxu0
        %v1118 = vadd.f32 %v960, %v1113
        %v1119 = vld [vmem:[%s6] sm:$0x1]
        %v1121 = vlaneseq
        %v1122 = vshrl.u32 %v1121, 7
        %v1123 = vsub.s32 0, %v1122
        %v1124 = vrot.slane %v1119, %v1123
        %v1126 = vadd.f32 %v1118, %v1124
        %1127 = vst.msk [vmem:[%s336] sm:$0xff] %vm436, %v1126
        %s1128 = sand.u32 %s199, 1
        %s1129 = scalar_lea.sflag [#allocation5], %s1128
        %s1130 = sand.u32 %s199, 1
        %s1131 = smul.addr %s1130, 8
        %s1132 = scalar_lea.vmem [#allocation9], %s1131
        // Predicated region
        $region65: #{tpu_custom_call.1} parent=47 // pred_check
          %p1133 = pneg %p209
        $region66: #{tpu_custom_call.1} parent=47 // pred_check_branch
          %1135 = sbr.rel (%p1133) target = $region68
        $region67: #{tpu_custom_call.1} parent=47 // pred_region
          %s1137 = ssub.s32 128, 128
          %1138 = vsyncadd %s1129, %s1137
          %s1139 = sadd.s32 %s30, %s29
          %s1140 = smul.addr %s1139, 128
          %s1141 = scalar_lea.hbm %s7, %s1140
          %s1143 = sshll.u32 %s1132, 4
          %s1144 = int_to_ptr.vmem [resolvable:$true] %s1143
          %1146 = dma.vmem_to_hbm [thread:$0]  %s1144, 128, %s1141, %s1129
        $region68: #{tpu_custom_call.1} parent=47 // pred_fallthru
          _
      $region48: #{tpu_custom_call.1} parent=5 // pred_fallthru
        _
      %p1147 = scmp.le.s32.totalorder 2, %s20
      // Predicated region
      $region69: #{tpu_custom_call.1} parent=5 // pred_check
        %p1148 = pneg %p1147
      $region70: #{tpu_custom_call.1} parent=5 // pred_check_branch
        %1150 = sbr.rel (%p1148) target = $region72
      $region71: #{tpu_custom_call.1} parent=5 // pred_region
        %s1151 = ssub.s32 %s20, 2
        // Predicated region
        $region73: #{tpu_custom_call.1} parent=71 // pred_check
          %p1152 = pneg %p215
        $region74: #{tpu_custom_call.1} parent=71 // pred_check_branch
          %1154 = sbr.rel (%p1152) target = $region76
        $region75: #{tpu_custom_call.1} parent=71 // pred_region
          %s1155 = sand.u32 %s200, 1
          %s1156 = scalar_lea.sflag [#allocation5], %s1155
          %s1157 = sand.u32 %s200, 1
          %s1158 = smul.addr %s1157, 8
          %s1159 = scalar_lea.vmem [#allocation9], %s1158
          %1160 = dma.done %s1156, 128
        $region76: #{tpu_custom_call.1} parent=71 // pred_fallthru
          _
      $region72: #{tpu_custom_call.1} parent=5 // pred_fallthru
        _
    $region6: #{tpu_custom_call.1} parent=1 // loop_footer
      %s24 = sadd.s32 1, %s20
    $region7: #{tpu_custom_call.1} parent=1 // loop_footer_branch
      %19 = sbr.rel target = $region3
    $region8: #{tpu_custom_call.1} parent=1 // loop_exit
      _
    %1161 = vsyncpa [#allocation4], 1
    %s1162 = scalar_lea.sflag [#allocation4], 1
    %1163 = vsyncpa %s1162, 1
    %1164 = vsyncpa [#allocation7], 1
    %1165 = vsyncpa [#allocation5], 1
    %s1166 = scalar_lea.sflag [#allocation5], 1
    %1167 = vsyncpa %s1166, 1

</llo_original>
